<compile_context>
chip_gen: v7x
topology: tpu7x:2x2x1
jax: 0.10.0
libtpu: 0.0.40
codegen_flags: <defaults>
</compile_context>

<pallas_src>
import jax
import jax.numpy as jnp
from jax.experimental import pallas as pl
from jax.experimental.pallas import tpu as pltpu

# ----- module hyper-parameters (FastAttPool defaults) -----
LATENT_DIM = (32, 32, 32, 1)
TOTAL_LATENT = sum(LATENT_DIM)                  # 97 == dense_dim
D_PAD = 128                                     # lane-padded feature width
HEAD_CNT = 2
HEAD_DIMS = tuple(
    int((i + 1) * TOTAL_LATENT / HEAD_CNT) - int(i * TOTAL_LATENT / HEAD_CNT)
    for i in range(HEAD_CNT))                   # (48, 49)
OUTPUT_DIM = 8
NUM_NODE_FEATS = 4
BN_EPS = 1e-5

_LAYER_LANE_OFF = (0, 32, 64, 96)               # output lane offset of each conv layer

# fused attention-weight layout (columns of the (128, 128) constant):
#   col 0 / 1   -> attention scores of head 0 / 1
#   cols 2..49  -> projection of head 0 (48)
#   cols 50..98 -> projection of head 1 (49)
#   cols 99..127-> zero padding
_PROJ_OFFS = []
_off = HEAD_CNT
for _hd in HEAD_DIMS:
    _PROJ_OFFS.append(_off)
    _off += _hd
_PROJ_OFFS = tuple(_PROJ_OFFS)                  # (2, 50)


# --------------------------------------------------------------------------
# Kernel A: graph-convolution stack for a block of Bt graphs
# --------------------------------------------------------------------------
def gnn_conv_kernel(node_ref, adj_ref, invdeg_ref, w0_ref, w_ref, b_ref,
                    out_ref, stats_ref):
    bt, n, _ = node_ref.shape
    adj = adj_ref[...]                           # (Bt, N, N) bf16 0/1 adjacency
    inv_deg = invdeg_ref[...]                    # (Bt, N, 1) f32 = 1/(degree+1)

    cur = node_ref[...]                          # (Bt, N, F) f32
    h_acc = None
    for l in range(4):                           # static unroll over the 4 conv layers
        # n2npool = A @ h + h : bf16 MXU operands, f32 accumulation
        n2n = jnp.einsum('bnm,bmf->bnf', adj, cur.astype(jnp.bfloat16),
                         preferred_element_type=jnp.float32) + cur
        k = n2n.shape[-1]
        w = w0_ref[...] if l == 0 else w_ref[l - 1]          # lane-aligned (K, 128) slab
        lin = jnp.dot(n2n.reshape(bt * n, k), w,
                      preferred_element_type=jnp.float32) + b_ref[l:l + 1, :]
        # zero weight columns / biases keep lanes outside this layer's 32-wide
        # slot at exactly 0 after tanh; inv_deg multiply replaces the divide.
        act = jnp.tanh(lin.reshape(bt, n, D_PAD) * inv_deg)  # (Bt, N, 128) f32
        h_acc = act if h_acc is None else h_acc + act        # disjoint-lane layers
        cur = act

    # single unmasked 128-lane store of the whole block (bf16 HBM writeback)
    out_ref[...] = h_acc.astype(out_ref.dtype)

    # Per-block BatchNorm partial stats from the in-register f32 accumulator
    # (no re-read of out_ref, no extra pass over h_nodes in the wrapper).
    hflat = h_acc.reshape(bt * n, D_PAD)
    ssum = jnp.sum(hflat, axis=0, keepdims=True)
    ssq = jnp.sum(hflat * hflat, axis=0, keepdims=True)
    stats_ref[...] = jnp.concatenate([ssum, ssq], axis=0).reshape(1, 2, D_PAD)


# --------------------------------------------------------------------------
# Kernel B: folded BatchNorm + 2-head attention pooling + output Linear + ReLU
# --------------------------------------------------------------------------
def pool_kernel(h_ref, scale_ref, shift_ref, wf_ref, bf_ref,
                wout_ref, bout_ref, out_ref):
    bt, n, d = h_ref.shape
    # folded BatchNorm: hn = h * scale + shift (scale/shift precomputed in JAX);
    # bf16 load, f32 math.
    hn = h_ref[...].astype(jnp.float32) * scale_ref[...] + shift_ref[...]

    # TODO(synk): FlexAddAttention internals (gfusedmax / layer-norm / lam / gamma)
    # are not available in the reference; a plain softmax additive-attention
    # pooling head with identical input/output dims is used per head.
    # One fused 128-lane matmul produces [score0 | score1 | proj0+b | proj1+b | 0].
    fused = jnp.dot(hn.reshape(bt * n, d), wf_ref[...],
                    preferred_element_type=jnp.float32) + bf_ref[...]
    fused = fused.reshape(bt, n, d)

    scores = fused[:, :, 0:HEAD_CNT]                                 # (Bt, N, 2)
    s = scores - jnp.max(scores, axis=1, keepdims=True)              # softmax over nodes
    e = jnp.exp(s)
    a = e * pl.reciprocal(jnp.sum(e, axis=1, keepdims=True), approx=True)

    # Both heads pooled with one small batched matmul on the MXU.  Unused lanes
    # (scores / padding) are killed by zero rows in the packed output weight.
    pooled = jnp.einsum('bnh,bnd->bhd', a, fused,
                        preferred_element_type=jnp.float32)          # (Bt, 2, 128)
    pooled = pooled.reshape(bt, HEAD_CNT * d)                        # (Bt, 256)

    out_lin = jnp.dot(pooled, wout_ref[...],
                      preferred_element_type=jnp.float32) + bout_ref[...]
    # forward does F.relu(F.relu(x)); relu is idempotent so a single max suffices.
    out_ref[...] = jnp.maximum(out_lin, 0.0).reshape(bt, 1, OUTPUT_DIM)


# --------------------------------------------------------------------------
# VMEM-aware tiling policy
# --------------------------------------------------------------------------
def _vmem_config():
    """(vmem_limit_bytes, block-data budget) sized per TPU generation."""
    try:
        cap = int(pltpu.get_tpu_info().vmem_capacity_bytes)
    except Exception:                             # conservative (v7x-sized) fallback
        cap = 64 * 1024 * 1024
    limit = min(cap * 3 // 4, 100 * 1024 * 1024)  # 48 MiB on v7x, 96 MiB on v5e/v6e
    return limit, limit // 2


def _pick_block(batch, per_graph_bytes, budget_bytes):
    """Largest divisor of `batch` whose block fits the VMEM budget while keeping
    enough grid steps for pipelining and the v7x megacore split."""
    min_steps = 2 if batch < 8 else 4
    best = 1                                      # never fall back to whole batch
    for d in range(1, batch + 1):
        if batch % d:
            continue
        if d * per_graph_bytes > budget_bytes:
            continue
        if batch // d < min(min_steps, batch):
            continue
        best = d
    return best


# --------------------------------------------------------------------------
# Wrapper
# --------------------------------------------------------------------------
@jax.jit
def fast_att_pool_forward(node_feat, adj, degs, params):
    B, N, F = node_feat.shape
    adj = adj.astype(jnp.bfloat16)                # 0/1 exact in bf16; halves adj stream
    inv_degs = (1.0 / degs).astype(jnp.float32)   # replaces 4 per-layer divides

    vmem_limit, vmem_budget = _vmem_config()
    cparams = pltpu.CompilerParams(
        dimension_semantics=("parallel",),
        vmem_limit_bytes=vmem_limit)

    # ---- pack conv weights/biases as lane-aligned 128-wide slabs ----
    w0p = jnp.zeros((F, D_PAD), jnp.float32).at[:, 0:32].set(params["w0"])
    wrest = jnp.zeros((3, D_PAD, D_PAD), jnp.float32)
    bpack = jnp.zeros((4, D_PAD), jnp.float32)
    bpack = bpack.at[0, 0:32].set(params["b0"][0])
    for l in range(1, 4):
        r0 = _LAYER_LANE_OFF[l - 1]               # input lanes of layer l
        c0 = _LAYER_LANE_OFF[l]                   # output lanes of layer l
        w = params[f"w{l}"]
        wrest = wrest.at[l - 1, r0:r0 + w.shape[0], c0:c0 + w.shape[1]].set(w)
        bpack = bpack.at[l, c0:c0 + w.shape[1]].set(params[f"b{l}"][0])

    # ---- Kernel A: conv stack, lane-dense bf16 output + BN partial stats ----
    # TODO(synk): graphs are assumed padded to a shared N with no ragged-size
    # mask (pads would leak into BN stats / softmax, as in the dense-batch
    # formulation used here).
    # TODO(synk): for very large N even a single graph's (N,N) adjacency block
    # may exceed the VMEM budget; that case needs an extra reduction grid axis.
    bytes_a = (2 * (N * N * 2 + N * F * 4 + N * 4 + N * D_PAD * 2)   # dbl-buffered I/O
               + 6 * N * D_PAD * 4)                                  # f32 working set
    bta = _pick_block(B, bytes_a, vmem_budget)
    grid_a = B // bta
    h_nodes, stats_part = pl.pallas_call(
        gnn_conv_kernel,
        out_shape=(jax.ShapeDtypeStruct((B, N, D_PAD), jnp.bfloat16),
                   jax.ShapeDtypeStruct((grid_a, 2, D_PAD), jnp.float32)),
        grid=(grid_a,),
        in_specs=[
            pl.BlockSpec((bta, N, F), lambda g: (g, 0, 0)),
            pl.BlockSpec((bta, N, N), lambda g: (g, 0, 0)),
            pl.BlockSpec((bta, N, 1), lambda g: (g, 0, 0)),
            pl.BlockSpec((F, D_PAD), lambda g: (0, 0)),
            pl.BlockSpec((3, D_PAD, D_PAD), lambda g: (0, 0, 0)),
            pl.BlockSpec((4, D_PAD), lambda g: (0, 0)),
        ],
        out_specs=(pl.BlockSpec((bta, N, D_PAD), lambda g: (g, 0, 0)),
                   pl.BlockSpec((1, 2, D_PAD), lambda g: (g, 0, 0))),
        compiler_params=cparams,
    )(node_feat, adj, inv_degs, w0p, wrest, bpack)

    # ---- fold BatchNorm1d (batch statistics, biased var) into scale/shift ----
    count = float(B * N)
    stats = jnp.sum(stats_part, axis=0)                     # (2, 128)
    mean = stats[0:1] / count                               # (1, 128)
    var = jnp.maximum(stats[1:2] / count - mean * mean, 0.0)
    gamma = jnp.zeros((1, D_PAD), jnp.float32).at[:, :TOTAL_LATENT].set(params["bn_g"])
    beta = jnp.zeros((1, D_PAD), jnp.float32).at[:, :TOTAL_LATENT].set(params["bn_b"])
    scale = gamma * jax.lax.rsqrt(var + BN_EPS)             # padded lanes -> 0
    shift = beta - mean * scale

    # ---- fuse both attention heads (scores + projections) into one matmul ----
    wf = jnp.zeros((D_PAD, D_PAD), jnp.float32)
    bf = jnp.zeros((1, D_PAD), jnp.float32)
    woutp = jnp.zeros((HEAD_CNT * D_PAD, OUTPUT_DIM), jnp.float32)
    row0 = 0
    for i, hd in enumerate(HEAD_DIMS):
        po = _PROJ_OFFS[i]
        wf = wf.at[0:TOTAL_LATENT, i:i + 1].set(params[f"watt{i}"])
        wf = wf.at[0:TOTAL_LATENT, po:po + hd].set(params[f"wproj{i}"])
        bf = bf.at[:, po:po + hd].set(params[f"bproj{i}"])
        # output weight placed so each head's pooled 128-lane vector hits the
        # right rows; all other rows (scores / other head / padding) are zero.
        woutp = woutp.at[i * D_PAD + po:i * D_PAD + po + hd, :].set(
            params["wout"][row0:row0 + hd])
        row0 += hd

    # ---- Kernel B: tiled over graphs (block size decoupled from Kernel A) ----
    bytes_b = 2 * N * D_PAD * 2 + 4 * N * D_PAD * 4
    btb = _pick_block(B, bytes_b, vmem_budget)
    grid_b = B // btb
    out = pl.pallas_call(
        pool_kernel,
        out_shape=jax.ShapeDtypeStruct((B, 1, OUTPUT_DIM), jnp.float32),
        grid=(grid_b,),
        in_specs=[
            pl.BlockSpec((btb, N, D_PAD), lambda g: (g, 0, 0)),
            pl.BlockSpec((1, D_PAD), lambda g: (0, 0)),
            pl.BlockSpec((1, D_PAD), lambda g: (0, 0)),
            pl.BlockSpec((D_PAD, D_PAD), lambda g: (0, 0)),
            pl.BlockSpec((1, D_PAD), lambda g: (0, 0)),
            pl.BlockSpec((HEAD_CNT * D_PAD, OUTPUT_DIM), lambda g: (0, 0)),
            pl.BlockSpec((1, OUTPUT_DIM), lambda g: (0, 0)),
        ],
        out_specs=pl.BlockSpec((btb, 1, OUTPUT_DIM), lambda g: (g, 0, 0)),
        compiler_params=cparams,
    )(h_nodes, scale, shift, wf, bf, woutp, params["bout"])
    return out.reshape(B, OUTPUT_DIM)


# --------------------------------------------------------------------------
# Deterministic parameter init + example inputs
# --------------------------------------------------------------------------
def init_params(key):
    keys = jax.random.split(key, 20)
    k = iter(keys)
    p = {}
    dims = (NUM_NODE_FEATS,) + LATENT_DIM       # F->32, 32->32, 32->32, 32->1
    for i in range(len(LATENT_DIM)):
        p[f"w{i}"] = 0.1 * jax.random.normal(next(k), (dims[i], dims[i + 1]), jnp.float32)
        p[f"b{i}"] = 0.1 * jax.random.normal(next(k), (1, dims[i + 1]), jnp.float32)
    p["bn_g"] = jnp.ones((1, TOTAL_LATENT), jnp.float32)
    p["bn_b"] = jnp.zeros((1, TOTAL_LATENT), jnp.float32)
    for i, hdim in enumerate(HEAD_DIMS):
        p[f"watt{i}"] = 0.1 * jax.random.normal(next(k), (TOTAL_LATENT, 1), jnp.float32)
        p[f"wproj{i}"] = 0.1 * jax.random.normal(next(k), (TOTAL_LATENT, hdim), jnp.float32)
        p[f"bproj{i}"] = 0.1 * jax.random.normal(next(k), (1, hdim), jnp.float32)
    p["wout"] = 0.1 * jax.random.normal(next(k), (TOTAL_LATENT, OUTPUT_DIM), jnp.float32)
    p["bout"] = 0.1 * jax.random.normal(next(k), (1, OUTPUT_DIM), jnp.float32)
    return p


def make_inputs(key, B, N, F):
    k1, k2 = jax.random.split(key)
    node_feat = jax.random.normal(k1, (B, N, F), jnp.float32)
    # symmetric 0/1 adjacency, no self loops (matches build_graph)
    raw = jax.random.bernoulli(k2, 0.3, (B, N, N)).astype(jnp.float32)
    adj = jnp.clip(raw + jnp.swapaxes(raw, 1, 2), 0.0, 1.0)
    eye = jnp.eye(N, dtype=jnp.float32)[None]
    adj = adj * (1.0 - eye)
    degs = jnp.sum(adj, axis=-1, keepdims=True) + 1.0       # degree + 1 (exact in f32)
    adj = adj.astype(jnp.bfloat16)                          # 0/1 exact; bf16 HBM stream
    return node_feat, adj, degs


if __name__ == "__main__":
    B, N = 2, 16
    key = jax.random.PRNGKey(0)
    kp, kx = jax.random.split(key)
    params = init_params(kp)
    node_feat, adj, degs = make_inputs(kx, B, N, NUM_NODE_FEATS)

    out = fast_att_pool_forward(node_feat, adj, degs, params)
    out = jax.block_until_ready(out)
    assert out.shape == (B, OUTPUT_DIM)
    assert bool(jnp.all(jnp.isfinite(out)))
    print("KERNEL_OK")
</pallas_src>

<mosaic_0001>
module attributes {stable_mosaic.version = 11 : i64} {
  func.func @gnn_conv_kernel(%arg0: i32, %arg1: memref<1x16x4xf32, #tpu.memory_space<vmem>>, %arg2: memref<1x16x16xbf16, #tpu.memory_space<vmem>>, %arg3: memref<1x16x1xf32, #tpu.memory_space<vmem>>, %arg4: memref<4x128xf32, #tpu.memory_space<vmem>>, %arg5: memref<3x128x128xf32, #tpu.memory_space<vmem>>, %arg6: memref<4x128xf32, #tpu.memory_space<vmem>>, %arg7: memref<1x16x128xbf16, #tpu.memory_space<vmem>>, %arg8: memref<1x2x128xf32, #tpu.memory_space<vmem>>) attributes {dimension_semantics = [#tpu.dimension_semantics<parallel>], iteration_bounds = array<i64: 2>, scalar_prefetch = 0 : i64, scratch_operands = 0 : i64, tpu.core_type = #tpu.core_type<tc>, window_params = [{transform_indices = @transform_0, window_bounds = array<i64: 1, 16, 4>}, {transform_indices = @transform_1, window_bounds = array<i64: 1, 16, 16>}, {transform_indices = @transform_2, window_bounds = array<i64: 1, 16, 1>}, {pipeline_mode = #tpu.pipeline_mode<synchronous>, transform_indices = @transform_3, window_bounds = array<i64: 4, 128>}, {pipeline_mode = #tpu.pipeline_mode<synchronous>, transform_indices = @transform_4, window_bounds = array<i64: 3, 128, 128>}, {pipeline_mode = #tpu.pipeline_mode<synchronous>, transform_indices = @transform_5, window_bounds = array<i64: 4, 128>}, {transform_indices = @transform_6, window_bounds = array<i64: 1, 16, 128>}, {transform_indices = @transform_7, window_bounds = array<i64: 1, 2, 128>}]} {
    %c0 = arith.constant 0 : index
    %c0_0 = arith.constant 0 : index
    %c0_1 = arith.constant 0 : index
    %0 = vector.load %arg2[%c0, %c0_0, %c0_1] : memref<1x16x16xbf16, #tpu.memory_space<vmem>>, vector<1x16x16xbf16>
    %c0_2 = arith.constant 0 : index
    %c0_3 = arith.constant 0 : index
    %c0_4 = arith.constant 0 : index
    %1 = vector.load %arg3[%c0_2, %c0_3, %c0_4] : memref<1x16x1xf32, #tpu.memory_space<vmem>>, vector<1x16x1xf32>
    %c0_5 = arith.constant 0 : index
    %c0_6 = arith.constant 0 : index
    %c0_7 = arith.constant 0 : index
    %2 = vector.load %arg1[%c0_5, %c0_6, %c0_7] : memref<1x16x4xf32, #tpu.memory_space<vmem>>, vector<1x16x4xf32>
    %3 = arith.truncf %2 : vector<1x16x4xf32> to vector<1x16x4xbf16>
    "tpu.trace_start"() <{level = 10 : i32, message = "bnm,bmf->bnf"}> : () -> ()
    %cst = arith.constant dense<0.000000e+00> : vector<1x16x4xf32>
    %4 = tpu.matmul %0, %3, %cst {dimension_numbers = #tpu.dot_dimension_numbers<[2], [1], [1], [2], [0, 0, 0, 1, 1, 2], [0], [0]>} : vector<1x16x16xbf16>, vector<1x16x4xbf16>, vector<1x16x4xf32> -> vector<1x16x4xf32>
    "tpu.trace_stop"() : () -> ()
    %5 = arith.addf %4, %2 : vector<1x16x4xf32>
    %c0_8 = arith.constant 0 : index
    %c0_9 = arith.constant 0 : index
    %6 = vector.load %arg4[%c0_8, %c0_9] : memref<4x128xf32, #tpu.memory_space<vmem>>, vector<4x128xf32>
    %7 = vector.shape_cast %5 : vector<1x16x4xf32> to vector<16x4xf32>
    %cst_10 = arith.constant dense<0.000000e+00> : vector<16x128xf32>
    %8 = tpu.matmul %7, %6, %cst_10 {dimension_numbers = #tpu.dot_dimension_numbers<[1], [0], [0], [1], [0, 0, 1, 1], [], []>} : vector<16x4xf32>, vector<4x128xf32>, vector<16x128xf32> -> vector<16x128xf32>
    %c0_11 = arith.constant 0 : index
    %c0_12 = arith.constant 0 : index
    %9 = vector.load %arg6[%c0_11, %c0_12] : memref<4x128xf32, #tpu.memory_space<vmem>>, vector<1x128xf32>
    %10 = vector.broadcast %9 : vector<1x128xf32> to vector<16x128xf32>
    %11 = arith.addf %8, %10 : vector<16x128xf32>
    %12 = vector.shape_cast %11 : vector<16x128xf32> to vector<1x16x128xf32>
    %13 = vector.broadcast %1 : vector<1x16x1xf32> to vector<1x16x128xf32>
    %14 = arith.mulf %12, %13 : vector<1x16x128xf32>
    %15 = math.tanh %14 : vector<1x16x128xf32>
    %16 = arith.truncf %15 : vector<1x16x128xf32> to vector<1x16x128xbf16>
    "tpu.trace_start"() <{level = 10 : i32, message = "bnm,bmf->bnf"}> : () -> ()
    %cst_13 = arith.constant dense<0.000000e+00> : vector<1x16x128xf32>
    %17 = tpu.matmul %0, %16, %cst_13 {dimension_numbers = #tpu.dot_dimension_numbers<[2], [1], [1], [2], [0, 0, 0, 1, 1, 2], [0], [0]>} : vector<1x16x16xbf16>, vector<1x16x128xbf16>, vector<1x16x128xf32> -> vector<1x16x128xf32>
    "tpu.trace_stop"() : () -> ()
    %18 = arith.addf %17, %15 : vector<1x16x128xf32>
    %c0_14 = arith.constant 0 : index
    %c0_15 = arith.constant 0 : index
    %c0_16 = arith.constant 0 : index
    %19 = vector.load %arg5[%c0_14, %c0_15, %c0_16] : memref<3x128x128xf32, #tpu.memory_space<vmem>>, vector<1x128x128xf32>
    %20 = vector.shape_cast %19 : vector<1x128x128xf32> to vector<128x128xf32>
    %21 = vector.shape_cast %18 : vector<1x16x128xf32> to vector<16x128xf32>
    %cst_17 = arith.constant dense<0.000000e+00> : vector<16x128xf32>
    %22 = tpu.matmul %21, %20, %cst_17 {dimension_numbers = #tpu.dot_dimension_numbers<[1], [0], [0], [1], [0, 0, 1, 1], [], []>} : vector<16x128xf32>, vector<128x128xf32>, vector<16x128xf32> -> vector<16x128xf32>
    %c1 = arith.constant 1 : index
    %c0_18 = arith.constant 0 : index
    %23 = vector.load %arg6[%c1, %c0_18] : memref<4x128xf32, #tpu.memory_space<vmem>>, vector<1x128xf32>
    %24 = vector.broadcast %23 : vector<1x128xf32> to vector<16x128xf32>
    %25 = arith.addf %22, %24 : vector<16x128xf32>
    %26 = vector.shape_cast %25 : vector<16x128xf32> to vector<1x16x128xf32>
    %27 = vector.broadcast %1 : vector<1x16x1xf32> to vector<1x16x128xf32>
    %28 = arith.mulf %26, %27 : vector<1x16x128xf32>
    %29 = math.tanh %28 : vector<1x16x128xf32>
    %30 = arith.addf %15, %29 : vector<1x16x128xf32>
    %31 = arith.truncf %29 : vector<1x16x128xf32> to vector<1x16x128xbf16>
    "tpu.trace_start"() <{level = 10 : i32, message = "bnm,bmf->bnf"}> : () -> ()
    %cst_19 = arith.constant dense<0.000000e+00> : vector<1x16x128xf32>
    %32 = tpu.matmul %0, %31, %cst_19 {dimension_numbers = #tpu.dot_dimension_numbers<[2], [1], [1], [2], [0, 0, 0, 1, 1, 2], [0], [0]>} : vector<1x16x16xbf16>, vector<1x16x128xbf16>, vector<1x16x128xf32> -> vector<1x16x128xf32>
    "tpu.trace_stop"() : () -> ()
    %33 = arith.addf %32, %29 : vector<1x16x128xf32>
    %c1_20 = arith.constant 1 : index
    %c0_21 = arith.constant 0 : index
    %c0_22 = arith.constant 0 : index
    %34 = vector.load %arg5[%c1_20, %c0_21, %c0_22] : memref<3x128x128xf32, #tpu.memory_space<vmem>>, vector<1x128x128xf32>
    %35 = vector.shape_cast %34 : vector<1x128x128xf32> to vector<128x128xf32>
    %36 = vector.shape_cast %33 : vector<1x16x128xf32> to vector<16x128xf32>
    %cst_23 = arith.constant dense<0.000000e+00> : vector<16x128xf32>
    %37 = tpu.matmul %36, %35, %cst_23 {dimension_numbers = #tpu.dot_dimension_numbers<[1], [0], [0], [1], [0, 0, 1, 1], [], []>} : vector<16x128xf32>, vector<128x128xf32>, vector<16x128xf32> -> vector<16x128xf32>
    %c2 = arith.constant 2 : index
    %c0_24 = arith.constant 0 : index
    %38 = vector.load %arg6[%c2, %c0_24] : memref<4x128xf32, #tpu.memory_space<vmem>>, vector<1x128xf32>
    %39 = vector.broadcast %38 : vector<1x128xf32> to vector<16x128xf32>
    %40 = arith.addf %37, %39 : vector<16x128xf32>
    %41 = vector.shape_cast %40 : vector<16x128xf32> to vector<1x16x128xf32>
    %42 = vector.broadcast %1 : vector<1x16x1xf32> to vector<1x16x128xf32>
    %43 = arith.mulf %41, %42 : vector<1x16x128xf32>
    %44 = math.tanh %43 : vector<1x16x128xf32>
    %45 = arith.addf %30, %44 : vector<1x16x128xf32>
    %46 = arith.truncf %44 : vector<1x16x128xf32> to vector<1x16x128xbf16>
    "tpu.trace_start"() <{level = 10 : i32, message = "bnm,bmf->bnf"}> : () -> ()
    %cst_25 = arith.constant dense<0.000000e+00> : vector<1x16x128xf32>
    %47 = tpu.matmul %0, %46, %cst_25 {dimension_numbers = #tpu.dot_dimension_numbers<[2], [1], [1], [2], [0, 0, 0, 1, 1, 2], [0], [0]>} : vector<1x16x16xbf16>, vector<1x16x128xbf16>, vector<1x16x128xf32> -> vector<1x16x128xf32>
    "tpu.trace_stop"() : () -> ()
    %48 = arith.addf %47, %44 : vector<1x16x128xf32>
    %c2_26 = arith.constant 2 : index
    %c0_27 = arith.constant 0 : index
    %c0_28 = arith.constant 0 : index
    %49 = vector.load %arg5[%c2_26, %c0_27, %c0_28] : memref<3x128x128xf32, #tpu.memory_space<vmem>>, vector<1x128x128xf32>
    %50 = vector.shape_cast %49 : vector<1x128x128xf32> to vector<128x128xf32>
    %51 = vector.shape_cast %48 : vector<1x16x128xf32> to vector<16x128xf32>
    %cst_29 = arith.constant dense<0.000000e+00> : vector<16x128xf32>
    %52 = tpu.matmul %51, %50, %cst_29 {dimension_numbers = #tpu.dot_dimension_numbers<[1], [0], [0], [1], [0, 0, 1, 1], [], []>} : vector<16x128xf32>, vector<128x128xf32>, vector<16x128xf32> -> vector<16x128xf32>
    %c3 = arith.constant 3 : index
    %c0_30 = arith.constant 0 : index
    %53 = vector.load %arg6[%c3, %c0_30] : memref<4x128xf32, #tpu.memory_space<vmem>>, vector<1x128xf32>
    %54 = vector.broadcast %53 : vector<1x128xf32> to vector<16x128xf32>
    %55 = arith.addf %52, %54 : vector<16x128xf32>
    %56 = vector.shape_cast %55 : vector<16x128xf32> to vector<1x16x128xf32>
    %57 = vector.broadcast %1 : vector<1x16x1xf32> to vector<1x16x128xf32>
    %58 = arith.mulf %56, %57 : vector<1x16x128xf32>
    %59 = math.tanh %58 : vector<1x16x128xf32>
    %60 = arith.addf %45, %59 : vector<1x16x128xf32>
    %61 = arith.truncf %60 : vector<1x16x128xf32> to vector<1x16x128xbf16>
    %c0_31 = arith.constant 0 : index
    %c0_32 = arith.constant 0 : index
    %c0_33 = arith.constant 0 : index
    %62 = vector.load %arg7[%c0_31, %c0_32, %c0_33] : memref<1x16x128xbf16, #tpu.memory_space<vmem>>, vector<1x16x128xbf16>
    tpu.vector_store %arg7[%c0_31, %c0_32, %c0_33], %61 {strides = array<i32>} : memref<1x16x128xbf16, #tpu.memory_space<vmem>>, vector<1x16x128xbf16>,
    %63 = vector.shape_cast %60 : vector<1x16x128xf32> to vector<16x128xf32>
    %cst_34 = arith.constant dense<0.000000e+00> : vector<128xf32>
    %64 = vector.multi_reduction <add>, %63, %cst_34 [0] : vector<16x128xf32> to vector<128xf32>
    %65 = vector.shape_cast %64 : vector<128xf32> to vector<1x128xf32>
    %66 = arith.mulf %63, %63 : vector<16x128xf32>
    %cst_35 = arith.constant dense<0.000000e+00> : vector<128xf32>
    %67 = vector.multi_reduction <add>, %66, %cst_35 [0] : vector<16x128xf32> to vector<128xf32>
    %68 = vector.shape_cast %67 : vector<128xf32> to vector<1x128xf32>
    %69 = tpu.concatenate %65, %68 in 0 : vector<1x128xf32>, vector<1x128xf32> -> vector<2x128xf32>
    %70 = vector.shape_cast %69 : vector<2x128xf32> to vector<1x2x128xf32>
    %c0_36 = arith.constant 0 : index
    %c0_37 = arith.constant 0 : index
    %c0_38 = arith.constant 0 : index
    %71 = vector.load %arg8[%c0_36, %c0_37, %c0_38] : memref<1x2x128xf32, #tpu.memory_space<vmem>>, vector<1x2x128xf32>
    tpu.vector_store %arg8[%c0_36, %c0_37, %c0_38], %70 {strides = array<i32>} : memref<1x2x128xf32, #tpu.memory_space<vmem>>, vector<1x2x128xf32>,
    return
  }
  func.func @transform_0(%arg0: i32) -> (i32, i32, i32) {
    %c0_i32 = arith.constant 0 : i32
    %c0_i32_0 = arith.constant 0 : i32
    %c0_i32_1 = arith.constant 0 : i32
    return %arg0, %c0_i32, %c0_i32_0 : i32, i32, i32
  }
  func.func @transform_1(%arg0: i32) -> (i32, i32, i32) {
    %c0_i32 = arith.constant 0 : i32
    %c0_i32_0 = arith.constant 0 : i32
    %c0_i32_1 = arith.constant 0 : i32
    return %arg0, %c0_i32, %c0_i32_0 : i32, i32, i32
  }
  func.func @transform_2(%arg0: i32) -> (i32, i32, i32) {
    %c0_i32 = arith.constant 0 : i32
    %c0_i32_0 = arith.constant 0 : i32
    %c0_i32_1 = arith.constant 0 : i32
    return %arg0, %c0_i32, %c0_i32_0 : i32, i32, i32
  }
  func.func @transform_3(%arg0: i32) -> (i32, i32) {
    %c0_i32 = arith.constant 0 : i32
    %c0_i32_0 = arith.constant 0 : i32
    %c0_i32_1 = arith.constant 0 : i32
    return %c0_i32, %c0_i32_0 : i32, i32
  }
  func.func @transform_4(%arg0: i32) -> (i32, i32, i32) {
    %c0_i32 = arith.constant 0 : i32
    %c0_i32_0 = arith.constant 0 : i32
    %c0_i32_1 = arith.constant 0 : i32
    %c0_i32_2 = arith.constant 0 : i32
    return %c0_i32, %c0_i32_0, %c0_i32_1 : i32, i32, i32
  }
  func.func @transform_5(%arg0: i32) -> (i32, i32) {
    %c0_i32 = arith.constant 0 : i32
    %c0_i32_0 = arith.constant 0 : i32
    %c0_i32_1 = arith.constant 0 : i32
    return %c0_i32, %c0_i32_0 : i32, i32
  }
  func.func @transform_6(%arg0: i32) -> (i32, i32, i32) {
    %c0_i32 = arith.constant 0 : i32
    %c0_i32_0 = arith.constant 0 : i32
    %c0_i32_1 = arith.constant 0 : i32
    return %arg0, %c0_i32, %c0_i32_0 : i32, i32, i32
  }
  func.func @transform_7(%arg0: i32) -> (i32, i32, i32) {
    %c0_i32 = arith.constant 0 : i32
    %c0_i32_0 = arith.constant 0 : i32
    %c0_i32_1 = arith.constant 0 : i32
    return %arg0, %c0_i32, %c0_i32_0 : i32, i32, i32
  }
}

module attributes {stable_mosaic.version = 11 : i64} {
  func.func @pool_kernel(%arg0: i32, %arg1: memref<1x16x128xbf16, #tpu.memory_space<vmem>>, %arg2: memref<1x128xf32, #tpu.memory_space<vmem>>, %arg3: memref<1x128xf32, #tpu.memory_space<vmem>>, %arg4: memref<128x128xf32, #tpu.memory_space<vmem>>, %arg5: memref<1x128xf32, #tpu.memory_space<vmem>>, %arg6: memref<256x8xf32, #tpu.memory_space<vmem>>, %arg7: memref<1x8xf32, #tpu.memory_space<vmem>>, %arg8: memref<1x1x8xf32, #tpu.memory_space<vmem>>) attributes {dimension_semantics = [#tpu.dimension_semantics<parallel>], iteration_bounds = array<i64: 2>, scalar_prefetch = 0 : i64, scratch_operands = 0 : i64, tpu.core_type = #tpu.core_type<tc>, window_params = [{transform_indices = @transform_0, window_bounds = array<i64: 1, 16, 128>}, {pipeline_mode = #tpu.pipeline_mode<synchronous>, transform_indices = @transform_1, window_bounds = array<i64: 1, 128>}, {pipeline_mode = #tpu.pipeline_mode<synchronous>, transform_indices = @transform_2, window_bounds = array<i64: 1, 128>}, {pipeline_mode = #tpu.pipeline_mode<synchronous>, transform_indices = @transform_3, window_bounds = array<i64: 128, 128>}, {pipeline_mode = #tpu.pipeline_mode<synchronous>, transform_indices = @transform_4, window_bounds = array<i64: 1, 128>}, {pipeline_mode = #tpu.pipeline_mode<synchronous>, transform_indices = @transform_5, window_bounds = array<i64: 256, 8>}, {pipeline_mode = #tpu.pipeline_mode<synchronous>, transform_indices = @transform_6, window_bounds = array<i64: 1, 8>}, {transform_indices = @transform_7, window_bounds = array<i64: 1, 1, 8>}]} {
    %c0 = arith.constant 0 : index
    %c0_0 = arith.constant 0 : index
    %c0_1 = arith.constant 0 : index
    %0 = vector.load %arg1[%c0, %c0_0, %c0_1] : memref<1x16x128xbf16, #tpu.memory_space<vmem>>, vector<1x16x128xbf16>
    %1 = arith.extf %0 : vector<1x16x128xbf16> to vector<1x16x128xf32>
    %c0_2 = arith.constant 0 : index
    %c0_3 = arith.constant 0 : index
    %2 = vector.load %arg2[%c0_2, %c0_3] : memref<1x128xf32, #tpu.memory_space<vmem>>, vector<1x128xf32>
    %3 = vector.shape_cast %2 : vector<1x128xf32> to vector<1x1x128xf32>
    %4 = vector.broadcast %3 : vector<1x1x128xf32> to vector<1x16x128xf32>
    %5 = arith.mulf %1, %4 : vector<1x16x128xf32>
    %c0_4 = arith.constant 0 : index
    %c0_5 = arith.constant 0 : index
    %6 = vector.load %arg3[%c0_4, %c0_5] : memref<1x128xf32, #tpu.memory_space<vmem>>, vector<1x128xf32>
    %7 = vector.shape_cast %6 : vector<1x128xf32> to vector<1x1x128xf32>
    %8 = vector.broadcast %7 : vector<1x1x128xf32> to vector<1x16x128xf32>
    %9 = arith.addf %5, %8 : vector<1x16x128xf32>
    %10 = vector.shape_cast %9 : vector<1x16x128xf32> to vector<16x128xf32>
    %c0_6 = arith.constant 0 : index
    %c0_7 = arith.constant 0 : index
    %11 = vector.load %arg4[%c0_6, %c0_7] : memref<128x128xf32, #tpu.memory_space<vmem>>, vector<128x128xf32>
    %cst = arith.constant dense<0.000000e+00> : vector<16x128xf32>
    %12 = tpu.matmul %10, %11, %cst {dimension_numbers = #tpu.dot_dimension_numbers<[1], [0], [0], [1], [0, 0, 1, 1], [], []>} : vector<16x128xf32>, vector<128x128xf32>, vector<16x128xf32> -> vector<16x128xf32>
    %c0_8 = arith.constant 0 : index
    %c0_9 = arith.constant 0 : index
    %13 = vector.load %arg5[%c0_8, %c0_9] : memref<1x128xf32, #tpu.memory_space<vmem>>, vector<1x128xf32>
    %14 = vector.broadcast %13 : vector<1x128xf32> to vector<16x128xf32>
    %15 = arith.addf %12, %14 : vector<16x128xf32>
    %16 = vector.shape_cast %15 : vector<16x128xf32> to vector<1x16x128xf32>
    %17 = vector.extract_strided_slice %16 {offsets = [0, 0, 0], sizes = [1, 16, 2], strides = [1, 1, 1]} : vector<1x16x128xf32> to vector<1x16x2xf32>
    %cst_10 = arith.constant dense<0xFF800000> : vector<1x2xf32>
    %18 = vector.multi_reduction <maximumf>, %17, %cst_10 [1] : vector<1x16x2xf32> to vector<1x2xf32>
    %19 = vector.shape_cast %18 : vector<1x2xf32> to vector<1x1x2xf32>
    %20 = vector.broadcast %19 : vector<1x1x2xf32> to vector<1x16x2xf32>
    %21 = arith.subf %17, %20 : vector<1x16x2xf32>
    %22 = math.exp %21 : vector<1x16x2xf32>
    %cst_11 = arith.constant dense<0.000000e+00> : vector<1x2xf32>
    %23 = vector.multi_reduction <add>, %22, %cst_11 [1] : vector<1x16x2xf32> to vector<1x2xf32>
    %24 = vector.shape_cast %23 : vector<1x2xf32> to vector<1x1x2xf32>
    %25 = tpu.reciprocal %24 {approx = true} : vector<1x1x2xf32> -> vector<1x1x2xf32>
    %26 = vector.broadcast %25 : vector<1x1x2xf32> to vector<1x16x2xf32>
    %27 = arith.mulf %22, %26 : vector<1x16x2xf32>
    "tpu.trace_start"() <{level = 10 : i32, message = "bnh,bnd->bhd"}> : () -> ()
    %cst_12 = arith.constant dense<0.000000e+00> : vector<1x2x128xf32>
    %28 = tpu.matmul %27, %16, %cst_12 {dimension_numbers = #tpu.dot_dimension_numbers<[1], [1], [2], [2], [0, 0, 0, 2, 1, 2], [0], [0]>} : vector<1x16x2xf32>, vector<1x16x128xf32>, vector<1x2x128xf32> -> vector<1x2x128xf32>
    "tpu.trace_stop"() : () -> ()
    %29 = vector.shape_cast %28 : vector<1x2x128xf32> to vector<1x256xf32>
    %c0_13 = arith.constant 0 : index
    %c0_14 = arith.constant 0 : index
    %30 = vector.load %arg6[%c0_13, %c0_14] : memref<256x8xf32, #tpu.memory_space<vmem>>, vector<256x8xf32>
    %cst_15 = arith.constant dense<0.000000e+00> : vector<1x8xf32>
    %31 = tpu.matmul %29, %30, %cst_15 {dimension_numbers = #tpu.dot_dimension_numbers<[1], [0], [0], [1], [0, 0, 1, 1], [], []>} : vector<1x256xf32>, vector<256x8xf32>, vector<1x8xf32> -> vector<1x8xf32>
    %c0_16 = arith.constant 0 : index
    %c0_17 = arith.constant 0 : index
    %32 = vector.load %arg7[%c0_16, %c0_17] : memref<1x8xf32, #tpu.memory_space<vmem>>, vector<1x8xf32>
    %33 = arith.addf %31, %32 : vector<1x8xf32>
    %cst_18 = arith.constant 0.000000e+00 : f32
    %34 = vector.broadcast %cst_18 : f32 to vector<1x8xf32>
    %35 = arith.maximumf %33, %34 : vector<1x8xf32>
    %36 = vector.shape_cast %35 : vector<1x8xf32> to vector<1x1x8xf32>
    %c0_19 = arith.constant 0 : index
    %c0_20 = arith.constant 0 : index
    %c0_21 = arith.constant 0 : index
    %37 = vector.load %arg8[%c0_19, %c0_20, %c0_21] : memref<1x1x8xf32, #tpu.memory_space<vmem>>, vector<1x1x8xf32>
    tpu.vector_store %arg8[%c0_19, %c0_20, %c0_21], %36 {strides = array<i32>} : memref<1x1x8xf32, #tpu.memory_space<vmem>>, vector<1x1x8xf32>,
    return
  }
  func.func @transform_0(%arg0: i32) -> (i32, i32, i32) {
    %c0_i32 = arith.constant 0 : i32
    %c0_i32_0 = arith.constant 0 : i32
    %c0_i32_1 = arith.constant 0 : i32
    return %arg0, %c0_i32, %c0_i32_0 : i32, i32, i32
  }
  func.func @transform_1(%arg0: i32) -> (i32, i32) {
    %c0_i32 = arith.constant 0 : i32
    %c0_i32_0 = arith.constant 0 : i32
    %c0_i32_1 = arith.constant 0 : i32
    return %c0_i32, %c0_i32_0 : i32, i32
  }
  func.func @transform_2(%arg0: i32) -> (i32, i32) {
    %c0_i32 = arith.constant 0 : i32
    %c0_i32_0 = arith.constant 0 : i32
    %c0_i32_1 = arith.constant 0 : i32
    return %c0_i32, %c0_i32_0 : i32, i32
  }
  func.func @transform_3(%arg0: i32) -> (i32, i32) {
    %c0_i32 = arith.constant 0 : i32
    %c0_i32_0 = arith.constant 0 : i32
    %c0_i32_1 = arith.constant 0 : i32
    return %c0_i32, %c0_i32_0 : i32, i32
  }
  func.func @transform_4(%arg0: i32) -> (i32, i32) {
    %c0_i32 = arith.constant 0 : i32
    %c0_i32_0 = arith.constant 0 : i32
    %c0_i32_1 = arith.constant 0 : i32
    return %c0_i32, %c0_i32_0 : i32, i32
  }
  func.func @transform_5(%arg0: i32) -> (i32, i32) {
    %c0_i32 = arith.constant 0 : i32
    %c0_i32_0 = arith.constant 0 : i32
    %c0_i32_1 = arith.constant 0 : i32
    return %c0_i32, %c0_i32_0 : i32, i32
  }
  func.func @transform_6(%arg0: i32) -> (i32, i32) {
    %c0_i32 = arith.constant 0 : i32
    %c0_i32_0 = arith.constant 0 : i32
    %c0_i32_1 = arith.constant 0 : i32
    return %c0_i32, %c0_i32_0 : i32, i32
  }
  func.func @transform_7(%arg0: i32) -> (i32, i32, i32) {
    %c0_i32 = arith.constant 0 : i32
    %c0_i32_0 = arith.constant 0 : i32
    %c0_i32_1 = arith.constant 0 : i32
    return %arg0, %c0_i32, %c0_i32_0 : i32, i32, i32
  }
}

</mosaic_0001>

<llo_original>
// kernel: fast_att_pool_forward.2
$region0: #{fast_att_pool_forward.2}
  #allocation0 [shape = 'u32[]', space=smem, size = 0x4, offset = 0x4, fixed_abs, tag = 'smem constant byte address 0x4 - core index']
  #allocation1 [shape = 'u32[144,128]{1,0:T(1,128)}', space=vmem, size = 0x12000, scoped, tag = 'internal scratch']
  %s0 = inlined_call_operand.vmem [shape: f32[2,16,4], index: 0, kind: input, shape index: {}]
  %s1 = inlined_call_operand.vmem [shape: bf16[2,16,16], index: 1, kind: input, shape index: {}]
  %s2 = inlined_call_operand.vmem [shape: f32[2,16,1], index: 2, kind: input, shape index: {}]
  %s3 = inlined_call_operand.vmem [shape: f32[4,128], index: 3, kind: input, shape index: {}]
  %s4 = inlined_call_operand.vmem [shape: f32[3,128,128], index: 4, kind: input, shape index: {}]
  %s5 = inlined_call_operand.vmem [shape: f32[4,128], index: 5, kind: input, shape index: {}]
  %s6 = inlined_call_operand.vmem [shape: bf16[2,16,128], index: 6, kind: output, shape index: {0}]
  %s7 = inlined_call_operand.vmem [shape: f32[2,2,128], index: 7, kind: output, shape index: {1}]
  %8 = xla_tuple %s6, %s7
  %s9 = sld [smem:[#allocation0]]
  $region65: #{fast_att_pool_forward.2} parent=0
    _
  %s11 = ssub.s32 1, %s9
  %s12 = scalar_select 0, %s11, %s9
  loop: start=0, step=1, limit=4
  $region2: #{fast_att_pool_forward.2} parent=0 // loop_pre_header
    _
  $region3: #{fast_att_pool_forward.2} parent=0 // loop_header
    %s14 = sphi 0, %s18
    %p15 = scmp.ge.s32.totalorder %s14, 4
    %s24 = sphi 0, %s26
    %s27 = sphi 0, %s24
    %s28 = sphi 0, %s27
    %s44 = sphi 0, %s28
    %s50 = sphi 0, %s52
    %s53 = sphi 0, %s50
    %s54 = sphi 0, %s53
    %s70 = sphi 0, %s54
    %s76 = sphi 0, %s78
    %s79 = sphi 0, %s76
    %s80 = sphi 0, %s79
    %s96 = sphi 0, %s80
    %s100 = sphi 0, %s100
    %s102 = sphi 0, %s100
    %s103 = sphi 0, %s102
    %s117 = sphi 0, %s103
    %s121 = sphi 0, %s121
    %s123 = sphi 0, %s121
    %s124 = sphi 0, %s123
    %s138 = sphi 0, %s124
    %s142 = sphi 0, %s142
    %s144 = sphi 0, %s142
    %s145 = sphi 0, %s144
    %s159 = sphi 0, %s145
    %s165 = sphi 0, %s167
    %s168 = sphi 0, %s165
    %s169 = sphi 0, %s168
    %s185 = sphi 0, %s169
    %s191 = sphi 0, %s193
    %s194 = sphi 0, %s191
    %s195 = sphi 0, %s194
    %s211 = sphi 0, %s195
  $region4: #{fast_att_pool_forward.2} parent=0 // loop_header_branch
    %17 = sbr.rel (%p15) target = $region8
  $region5: #{fast_att_pool_forward.2} parent=0 // loop_body
    %s19 = ssub.s32 %s14, 1
    %s20 = ssub.s32 %s14, 2
    %s21 = sadd.s32 %s14, 1
    %s22 = ssub.s32 %s14, %s21
    %p23 = scmp.eq.s32.totalorder %s22, 0
    %s25 = sadd.s32 %s24, 1
    %s26 = scalar_select %p23, %s24, %s25
    %p29 = pneg %p23
    %p30 = scmp.eq.s32.totalorder %s14, 1
    %p31 = por %p29, %p30
    %p32 = scmp.ne.s32.totalorder %s24, %s27
    %p33 = scmp.eq.s32.totalorder %s14, 0
    %p34 = por %p32, %p33
    %p35 = scmp.ne.s32.totalorder %s24, %s27
    %p36 = scmp.eq.s32.totalorder %s19, 1
    %p37 = por %p35, %p36
    %p38 = scmp.ne.s32.totalorder %s27, %s28
    %p39 = scmp.eq.s32.totalorder %s19, 0
    %p40 = por %p38, %p39
    %p41 = scmp.ne.s32.totalorder %s27, %s28
    %p42 = scmp.eq.s32.totalorder %s20, 1
    %p43 = por %p41, %p42
    %p45 = scmp.ne.s32.totalorder %s28, %s44
    %p46 = scmp.eq.s32.totalorder %s20, 0
    %p47 = por %p45, %p46
    %s48 = ssub.s32 %s14, %s21
    %p49 = scmp.eq.s32.totalorder %s48, 0
    %s51 = sadd.s32 %s50, 1
    %s52 = scalar_select %p49, %s50, %s51
    %p55 = pneg %p49
    %p56 = scmp.eq.s32.totalorder %s14, 1
    %p57 = por %p55, %p56
    %p58 = scmp.ne.s32.totalorder %s50, %s53
    %p59 = scmp.eq.s32.totalorder %s14, 0
    %p60 = por %p58, %p59
    %p61 = scmp.ne.s32.totalorder %s50, %s53
    %p62 = scmp.eq.s32.totalorder %s19, 1
    %p63 = por %p61, %p62
    %p64 = scmp.ne.s32.totalorder %s53, %s54
    %p65 = scmp.eq.s32.totalorder %s19, 0
    %p66 = por %p64, %p65
    %p67 = scmp.ne.s32.totalorder %s53, %s54
    %p68 = scmp.eq.s32.totalorder %s20, 1
    %p69 = por %p67, %p68
    %p71 = scmp.ne.s32.totalorder %s54, %s70
    %p72 = scmp.eq.s32.totalorder %s20, 0
    %p73 = por %p71, %p72
    %s74 = ssub.s32 %s14, %s21
    %p75 = scmp.eq.s32.totalorder %s74, 0
    %s77 = sadd.s32 %s76, 1
    %s78 = scalar_select %p75, %s76, %s77
    %p81 = pneg %p75
    %p82 = scmp.eq.s32.totalorder %s14, 1
    %p83 = por %p81, %p82
    %p84 = scmp.ne.s32.totalorder %s76, %s79
    %p85 = scmp.eq.s32.totalorder %s14, 0
    %p86 = por %p84, %p85
    %p87 = scmp.ne.s32.totalorder %s76, %s79
    %p88 = scmp.eq.s32.totalorder %s19, 1
    %p89 = por %p87, %p88
    %p90 = scmp.ne.s32.totalorder %s79, %s80
    %p91 = scmp.eq.s32.totalorder %s19, 0
    %p92 = por %p90, %p91
    %p93 = scmp.ne.s32.totalorder %s79, %s80
    %p94 = scmp.eq.s32.totalorder %s20, 1
    %p95 = por %p93, %p94
    %p97 = scmp.ne.s32.totalorder %s80, %s96
    %p98 = scmp.eq.s32.totalorder %s20, 0
    %p99 = por %p97, %p98
    %s101 = sadd.s32 %s100, 1
    %p104 = scmp.eq.s32.totalorder %s14, 1
    %p105 = scmp.ne.s32.totalorder %s100, %s102
    %p106 = scmp.eq.s32.totalorder %s14, 0
    %p107 = por %p105, %p106
    %p108 = scmp.ne.s32.totalorder %s100, %s102
    %p109 = scmp.eq.s32.totalorder %s19, 1
    %p110 = por %p108, %p109
    %p111 = scmp.ne.s32.totalorder %s102, %s103
    %p112 = scmp.eq.s32.totalorder %s19, 0
    %p113 = por %p111, %p112
    %p114 = scmp.ne.s32.totalorder %s102, %s103
    %p115 = scmp.eq.s32.totalorder %s20, 1
    %p116 = por %p114, %p115
    %p118 = scmp.ne.s32.totalorder %s103, %s117
    %p119 = scmp.eq.s32.totalorder %s20, 0
    %p120 = por %p118, %p119
    %s122 = sadd.s32 %s121, 1
    %p125 = scmp.eq.s32.totalorder %s14, 1
    %p126 = scmp.ne.s32.totalorder %s121, %s123
    %p127 = scmp.eq.s32.totalorder %s14, 0
    %p128 = por %p126, %p127
    %p129 = scmp.ne.s32.totalorder %s121, %s123
    %p130 = scmp.eq.s32.totalorder %s19, 1
    %p131 = por %p129, %p130
    %p132 = scmp.ne.s32.totalorder %s123, %s124
    %p133 = scmp.eq.s32.totalorder %s19, 0
    %p134 = por %p132, %p133
    %p135 = scmp.ne.s32.totalorder %s123, %s124
    %p136 = scmp.eq.s32.totalorder %s20, 1
    %p137 = por %p135, %p136
    %p139 = scmp.ne.s32.totalorder %s124, %s138
    %p140 = scmp.eq.s32.totalorder %s20, 0
    %p141 = por %p139, %p140
    %s143 = sadd.s32 %s142, 1
    %p146 = scmp.eq.s32.totalorder %s14, 1
    %p147 = scmp.ne.s32.totalorder %s142, %s144
    %p148 = scmp.eq.s32.totalorder %s14, 0
    %p149 = por %p147, %p148
    %p150 = scmp.ne.s32.totalorder %s142, %s144
    %p151 = scmp.eq.s32.totalorder %s19, 1
    %p152 = por %p150, %p151
    %p153 = scmp.ne.s32.totalorder %s144, %s145
    %p154 = scmp.eq.s32.totalorder %s19, 0
    %p155 = por %p153, %p154
    %p156 = scmp.ne.s32.totalorder %s144, %s145
    %p157 = scmp.eq.s32.totalorder %s20, 1
    %p158 = por %p156, %p157
    %p160 = scmp.ne.s32.totalorder %s145, %s159
    %p161 = scmp.eq.s32.totalorder %s20, 0
    %p162 = por %p160, %p161
    %s163 = ssub.s32 %s14, %s21
    %p164 = scmp.eq.s32.totalorder %s163, 0
    %s166 = sadd.s32 %s165, 1
    %s167 = scalar_select %p164, %s165, %s166
    %p170 = pneg %p164
    %p171 = scmp.eq.s32.totalorder %s14, 1
    %p172 = por %p170, %p171
    %p173 = scmp.ne.s32.totalorder %s165, %s168
    %p174 = scmp.eq.s32.totalorder %s14, 0
    %p175 = por %p173, %p174
    %p176 = scmp.ne.s32.totalorder %s165, %s168
    %p177 = scmp.eq.s32.totalorder %s19, 1
    %p178 = por %p176, %p177
    %p179 = scmp.ne.s32.totalorder %s168, %s169
    %p180 = scmp.eq.s32.totalorder %s19, 0
    %p181 = por %p179, %p180
    %p182 = scmp.ne.s32.totalorder %s168, %s169
    %p183 = scmp.eq.s32.totalorder %s20, 1
    %p184 = por %p182, %p183
    %p186 = scmp.ne.s32.totalorder %s169, %s185
    %p187 = scmp.eq.s32.totalorder %s20, 0
    %p188 = por %p186, %p187
    %s189 = ssub.s32 %s14, %s21
    %p190 = scmp.eq.s32.totalorder %s189, 0
    %s192 = sadd.s32 %s191, 1
    %s193 = scalar_select %p190, %s191, %s192
    %p196 = pneg %p190
    %p197 = scmp.eq.s32.totalorder %s14, 1
    %p198 = por %p196, %p197
    %p199 = scmp.ne.s32.totalorder %s191, %s194
    %p200 = scmp.eq.s32.totalorder %s14, 0
    %p201 = por %p199, %p200
    %p202 = scmp.ne.s32.totalorder %s191, %s194
    %p203 = scmp.eq.s32.totalorder %s19, 1
    %p204 = por %p202, %p203
    %p205 = scmp.ne.s32.totalorder %s194, %s195
    %p206 = scmp.eq.s32.totalorder %s19, 0
    %p207 = por %p205, %p206
    %p208 = scmp.ne.s32.totalorder %s194, %s195
    %p209 = scmp.eq.s32.totalorder %s20, 1
    %p210 = por %p208, %p209
    %p212 = scmp.ne.s32.totalorder %s195, %s211
    %p213 = scmp.eq.s32.totalorder %s20, 0
    %p214 = por %p212, %p213
    %p215 = scmp.le.s32.totalorder 1, %s14
    %p216 = scmp.lt.s32.totalorder %s14, 3
    %p217 = pnand %p215, %p216
    %p218 = pneg %p217
    // Predicated region
    $region9: #{fast_att_pool_forward.2} parent=5 // pred_check
      _
    $region10: #{fast_att_pool_forward.2} parent=5 // pred_check_branch
      %220 = sbr.rel (%p217) target = $region12
    $region11: #{fast_att_pool_forward.2} parent=5 // pred_region
      %s221 = ssub.s32 %s14, 1
      // Predicated region
      $region13: #{fast_att_pool_forward.2} parent=11 // pred_check
        %p222 = pneg %p113
      $region14: #{fast_att_pool_forward.2} parent=11 // pred_check_branch
        %224 = sbr.rel (%p222) target = $region16
      $region15: #{fast_att_pool_forward.2} parent=11 // pred_region
        _
      $region16: #{fast_att_pool_forward.2} parent=11 // pred_fallthru
        _
      // Predicated region
      $region17: #{fast_att_pool_forward.2} parent=11 // pred_check
        %p225 = pneg %p134
      $region18: #{fast_att_pool_forward.2} parent=11 // pred_check_branch
        %227 = sbr.rel (%p225) target = $region20
      $region19: #{fast_att_pool_forward.2} parent=11 // pred_region
        _
      $region20: #{fast_att_pool_forward.2} parent=11 // pred_fallthru
        _
      // Predicated region
      $region21: #{fast_att_pool_forward.2} parent=11 // pred_check
        %p228 = pneg %p155
      $region22: #{fast_att_pool_forward.2} parent=11 // pred_check_branch
        %230 = sbr.rel (%p228) target = $region24
      $region23: #{fast_att_pool_forward.2} parent=11 // pred_region
        _
      $region24: #{fast_att_pool_forward.2} parent=11 // pred_fallthru
        _
    $region12: #{fast_att_pool_forward.2} parent=5 // pred_fallthru
      _
    %p231 = scmp.lt.s32.totalorder %s14, 2
    // Predicated region
    $region25: #{fast_att_pool_forward.2} parent=5 // pred_check
      %p232 = pneg %p231
    $region26: #{fast_att_pool_forward.2} parent=5 // pred_check_branch
      %234 = sbr.rel (%p232) target = $region28
    $region27: #{fast_att_pool_forward.2} parent=5 // pred_region
      // Predicated region
      $region29: #{fast_att_pool_forward.2} parent=27 // pred_check
        %p235 = pneg %p34
      $region30: #{fast_att_pool_forward.2} parent=27 // pred_check_branch
        %237 = sbr.rel (%p235) target = $region32
      $region31: #{fast_att_pool_forward.2} parent=27 // pred_region
        %p238 = scmp.lt.s32.totalorder %s14, 1
        %s239 = scalar_select %p238, %s14, 1
        %s240 = smul.addr %s239, 2
        %s241 = smul.addr %s240, 8
        %s242 = scalar_lea.vmem %s0, %s241
      $region32: #{fast_att_pool_forward.2} parent=27 // pred_fallthru
        _
      // Predicated region
      $region33: #{fast_att_pool_forward.2} parent=27 // pred_check
        %p243 = pneg %p60
      $region34: #{fast_att_pool_forward.2} parent=27 // pred_check_branch
        %245 = sbr.rel (%p243) target = $region36
      $region35: #{fast_att_pool_forward.2} parent=27 // pred_region
        %p246 = scmp.lt.s32.totalorder %s14, 1
        %s247 = scalar_select %p246, %s14, 1
        %s248 = smul.addr %s247, 2
        %s249 = smul.addr %s248, 4
        %s250 = scalar_lea.vmem %s1, %s249
      $region36: #{fast_att_pool_forward.2} parent=27 // pred_fallthru
        _
      // Predicated region
      $region37: #{fast_att_pool_forward.2} parent=27 // pred_check
        %p251 = pneg %p86
      $region38: #{fast_att_pool_forward.2} parent=27 // pred_check_branch
        %253 = sbr.rel (%p251) target = $region40
      $region39: #{fast_att_pool_forward.2} parent=27 // pred_region
        %p254 = scmp.lt.s32.totalorder %s14, 1
        %s255 = scalar_select %p254, %s14, 1
        %s256 = smul.addr %s255, 2
        %s257 = smul.addr %s256, 8
        %s258 = scalar_lea.vmem %s2, %s257
      $region40: #{fast_att_pool_forward.2} parent=27 // pred_fallthru
        _
    $region28: #{fast_att_pool_forward.2} parent=5 // pred_fallthru
      _
    %p259 = scmp.le.s32.totalorder 1, %s14
    %p260 = scmp.lt.s32.totalorder %s14, 3
    %p261 = pnand %p259, %p260
    %p262 = pneg %p261
    // Predicated region
    $region41: #{fast_att_pool_forward.2} parent=5 // pred_check
      _
    $region42: #{fast_att_pool_forward.2} parent=5 // pred_check_branch
      %264 = sbr.rel (%p261) target = $region44
    $region43: #{fast_att_pool_forward.2} parent=5 // pred_region
      %s265 = ssub.s32 %s14, 1
      %p266 = scmp.lt.s32.totalorder %s19, 1
      %s267 = scalar_select %p266, %s19, 1
      %s268 = smul.addr %s267, 2
      %s269 = smul.addr %s268, 8
      %s270 = scalar_lea.vmem %s0, %s269
      %p271 = pneg %p40
      %p272 = pneg %p37
      %p273 = scmp.lt.s32.totalorder %s19, 1
      %s274 = scalar_select %p273, %s19, 1
      %s275 = smul.addr %s274, 2
      %s276 = smul.addr %s275, 4
      %s277 = scalar_lea.vmem %s1, %s276
      %p278 = pneg %p66
      %p279 = pneg %p63
      %p280 = scmp.lt.s32.totalorder %s19, 1
      %s281 = scalar_select %p280, %s19, 1
      %s282 = smul.addr %s281, 2
      %s283 = smul.addr %s282, 8
      %s284 = scalar_lea.vmem %s2, %s283
      %p285 = pneg %p92
      %p286 = pneg %p89
      %p287 = pneg %p113
      %p288 = pneg %p110
      %p289 = pneg %p134
      %p290 = pneg %p131
      %p291 = pneg %p155
      %p292 = pneg %p152
      %p293 = pneg %p181
      %p294 = pneg %p178
      %p295 = scmp.lt.s32.totalorder %s19, 1
      %s296 = scalar_select %p295, %s19, 1
      %s297 = smul.addr %s296, 2
      %s298 = smul.addr %s297, 4
      %s299 = scalar_lea.vmem %s6, %s298
      %p300 = pneg %p207
      %p301 = pneg %p204
      %p302 = scmp.lt.s32.totalorder %s19, 1
      %s303 = scalar_select %p302, %s19, 1
      %s304 = smul.addr %s303, 2
      %s305 = scalar_lea.vmem %s7, %s304
      %p306 = scmp.lt.s32.totalorder %s19, 1
      %s307 = scalar_select %p306, %s19, 1
      %s308 = smul.addr %s307, 2
      %s309 = smul.addr %s308, 8
      %s310 = scalar_lea.vmem %s0, %s309
      %p311 = scmp.lt.s32.totalorder %s19, 1
      %s312 = scalar_select %p311, %s19, 1
      %s313 = smul.addr %s312, 2
      %s314 = smul.addr %s313, 4
      %s315 = scalar_lea.vmem %s1, %s314
      %p316 = scmp.lt.s32.totalorder %s19, 1
      %s317 = scalar_select %p316, %s19, 1
      %s318 = smul.addr %s317, 2
      %s319 = smul.addr %s318, 8
      %s320 = scalar_lea.vmem %s2, %s319
      %p321 = scmp.lt.s32.totalorder %s19, 1
      %s322 = scalar_select %p321, %s19, 1
      %s323 = smul.addr %s322, 2
      %s324 = smul.addr %s323, 4
      %s325 = scalar_lea.vmem %s6, %s324
      %p326 = scmp.lt.s32.totalorder %s19, 1
      %s327 = scalar_select %p326, %s19, 1
      %s328 = smul.addr %s327, 2
      %s329 = scalar_lea.vmem %s7, %s328
      %v331 = vld [vmem:[%s315] sm:$0xf]
      %v332 = vld [vmem:[%s315 + $0x4] sm:$0xf]
      %v333 = vld [vmem:[%s320] sm:$0xff]
      %v334 = vld [vmem:[%s320 + $0x8] sm:$0xff]
      %v335 = vld [vmem:[%s310] sm:$0xff]
      %v336 = vld [vmem:[%s310 + $0x8] sm:$0xff]
      %v337 = vpack.c.bf16 %v336, %v335
      %v340 = vunpack.c.l.b16 %v331
      %v341 = vunpack.c.l.b16 %v332
      %v342 = vpack.c.b16 %v341, %v340
      %vm343 = vcmask 130048
      %v345 = vsel %vm343, %v342, 0
      %347 = vmatprep.subr.bf16.mxu0 0
      %348 = vmatpush1.bf16.msra.mxu0 %v337
      %349 = vmatprep.subr.bf16.mxu0 0
      %350 = vmatpush1.bf16.msra.mxu0 0
      %351 = vmatprep.subr.bf16.mxu0 0
      %352 = vmatpush1.bf16.msra.mxu0 0
      %353 = vmatprep.subr.bf16.mxu0 0
      %354 = vmatpush1.bf16.msra.mxu0 0
      %355 = vmatprep.subr.bf16.mxu0 0
      %356 = vmatpush1.bf16.msra.mxu0 0
      %357 = vmatprep.subr.bf16.mxu0 0
      %358 = vmatpush1.bf16.msra.mxu0 0
      %359 = vmatprep.subr.bf16.mxu0 0
      %360 = vmatpush1.bf16.msra.mxu0 0
      %361 = vmatprep.subr.bf16.mxu0 0
      %362 = vmatpush1.bf16.msra.mxu0 0
      %363 = vmatprep.subr.bf16.mxu0 0
      %364 = vmatpush1.bf16.msra.mxu0 0
      %365 = vmatprep.subr.bf16.mxu0 0
      %366 = vmatpush1.bf16.msra.mxu0 0
      %367 = vmatprep.subr.bf16.mxu0 0
      %368 = vmatpush1.bf16.msra.mxu0 0
      %369 = vmatprep.subr.bf16.mxu0 0
      %370 = vmatpush1.bf16.msra.mxu0 0
      %371 = vmatprep.subr.bf16.mxu0 0
      %372 = vmatpush1.bf16.msra.mxu0 0
      %373 = vmatprep.subr.bf16.mxu0 0
      %374 = vmatpush1.bf16.msra.mxu0 0
      %375 = vmatprep.subr.bf16.mxu0 0
      %376 = vmatpush1.bf16.msra.mxu0 0
      %377 = vmatprep.subr.bf16.mxu0 0
      %378 = vmatpush1.bf16.msra.mxu0 0
      %379 = vmatprep.mubr.bf16.mxu0 0
      %380 = vmatmul.mubr.bf16.gmra.mrb[0].mxu0 %v345
      %v381 = vpop.f32.mrb[0].mxu0
      %v382 = vadd.f32 %v335, %v381
      %v383 = vpop.f32.mrb[0].mxu0
      %v384 = vpop.f32.mrb[0].mxu0
      %v385 = vadd.f32 %v336, %v384
      %v386 = vpop.f32.mrb[0].mxu0
      %387 = vdwg.mxu0
      %v388 = vld [vmem:[%s3] sm:$0xf]
      %v389 = vld [vmem:[%s5] sm:$0x1]
      %v390 = vlaneseq
      %v391 = vshrl.u32 %v390, 7
      %v392 = vsub.s32 0, %v391
      %v393 = vrot.slane %v389, %v392
      %vm394 = vcmask 31744
      %v396 = vsel %vm394, %v382, 0
      %v399 = vsel %vm394, %v385, 0
      %vm401 = vcmask 1043456
      %v403 = vsel %vm401, %v388, 0
      %405 = vmatprep.subr.mxu0 0.0
      %406 = vmatpush1.msra.mxu0 %v403
      %407 = vmatprep.subr.mxu0 0.0
      %408 = vmatpush1.msra.mxu0 0.0
      %409 = vmatprep.subr.mxu0 0.0
      %410 = vmatpush1.msra.mxu0 0.0
      %411 = vmatprep.subr.mxu0 0.0
      %412 = vmatpush1.msra.mxu0 0.0
      %413 = vmatprep.subr.mxu0 0.0
      %414 = vmatpush1.msra.mxu0 0.0
      %415 = vmatprep.subr.mxu0 0.0
      %416 = vmatpush1.msra.mxu0 0.0
      %417 = vmatprep.subr.mxu0 0.0
      %418 = vmatpush1.msra.mxu0 0.0
      %419 = vmatprep.subr.mxu0 0.0
      %420 = vmatpush1.msra.mxu0 0.0
      %421 = vmatprep.subr.mxu0 0.0
      %422 = vmatpush1.msra.mxu0 0.0
      %423 = vmatprep.subr.mxu0 0.0
      %424 = vmatpush1.msra.mxu0 0.0
      %425 = vmatprep.subr.mxu0 0.0
      %426 = vmatpush1.msra.mxu0 0.0
      %427 = vmatprep.subr.mxu0 0.0
      %428 = vmatpush1.msra.mxu0 0.0
      %429 = vmatprep.subr.mxu0 0.0
      %430 = vmatpush1.msra.mxu0 0.0
      %431 = vmatprep.subr.mxu0 0.0
      %432 = vmatpush1.msra.mxu0 0.0
      %433 = vmatprep.subr.mxu0 0.0
      %434 = vmatpush1.msra.mxu0 0.0
      %435 = vmatprep.subr.mxu0 0.0
      %436 = vmatpush1.msra.mxu0 0.0
      %437 = vmatprep.subr.mxu0 0.0
      %438 = vmatpush1.msra.mxu0 0.0
      %439 = vmatprep.subr.mxu0 0.0
      %440 = vmatpush1.msra.mxu0 0.0
      %441 = vmatprep.subr.mxu0 0.0
      %442 = vmatpush1.msra.mxu0 0.0
      %443 = vmatprep.subr.mxu0 0.0
      %444 = vmatpush1.msra.mxu0 0.0
      %445 = vmatprep.subr.mxu0 0.0
      %446 = vmatpush1.msra.mxu0 0.0
      %447 = vmatprep.subr.mxu0 0.0
      %448 = vmatpush1.msra.mxu0 0.0
      %449 = vmatprep.subr.mxu0 0.0
      %450 = vmatpush1.msra.mxu0 0.0
      %451 = vmatprep.subr.mxu0 0.0
      %452 = vmatpush1.msra.mxu0 0.0
      %453 = vmatprep.subr.mxu0 0.0
      %454 = vmatpush1.msra.mxu0 0.0
      %455 = vmatprep.subr.mxu0 0.0
      %456 = vmatpush1.msra.mxu0 0.0
      %457 = vmatprep.subr.mxu0 0.0
      %458 = vmatpush1.msra.mxu0 0.0
      %459 = vmatprep.subr.mxu0 0.0
      %460 = vmatpush1.msra.mxu0 0.0
      %461 = vmatprep.subr.mxu0 0.0
      %462 = vmatpush1.msra.mxu0 0.0
      %463 = vmatprep.subr.mxu0 0.0
      %464 = vmatpush1.msra.mxu0 0.0
      %465 = vmatprep.subr.mxu0 0.0
      %466 = vmatpush1.msra.mxu0 0.0
      %467 = vmatprep.subr.mxu0 0.0
      %468 = vmatpush1.msra.mxu0 0.0
      %469 = vmatprep.mubr.f32.mxu0 0.0
      %470 = vmatmul.mubr.f32.gmra.mrb[0].mxu0 %v396
      %v471 = vpop.f32.mrb[0].mxu0
      %v472 = vadd.f32 %v393, %v471
      %v473 = vpop.f32.mrb[0].mxu0
      %474 = vmatprep.mubr.f32.mxu0 0.0
      %475 = vmatmul.mubr.f32.gmra.mrb[0].mxu0 %v399
      %v476 = vpop.f32.mrb[0].mxu0
      %v477 = vadd.f32 %v393, %v476
      %v478 = vpop.f32.mrb[0].mxu0
      %479 = vdwg.mxu0
      %481 = vset.pattern.permute.xlu0 0
      %482 = vperm.xlu0 %481, %v333
      %v483 = vpop.permute.xlu0 %482
      %486 = vset.pattern.permute.xlu0 0
      %487 = vperm.xlu0 %486, %v334
      %v488 = vpop.permute.xlu0 %487
      %v490 = vmul.f32 %v472, %v483
      %v491 = vmul.f32 %v477, %v488
      %v492 = vtanh.pop %v490
      %v493 = vtanh.pop %v491
      %v494 = vpack.c.bf16 %v493, %v492
      %495 = vmatprep.subr.bf16.mxu0 0
      %496 = vmatpush1.bf16.msra.mxu0 %v494
      %497 = vmatprep.subr.bf16.mxu0 0
      %498 = vmatpush1.bf16.msra.mxu0 0
      %499 = vmatprep.subr.bf16.mxu0 0
      %500 = vmatpush1.bf16.msra.mxu0 0
      %501 = vmatprep.subr.bf16.mxu0 0
      %502 = vmatpush1.bf16.msra.mxu0 0
      %503 = vmatprep.subr.bf16.mxu0 0
      %504 = vmatpush1.bf16.msra.mxu0 0
      %505 = vmatprep.subr.bf16.mxu0 0
      %506 = vmatpush1.bf16.msra.mxu0 0
      %507 = vmatprep.subr.bf16.mxu0 0
      %508 = vmatpush1.bf16.msra.mxu0 0
      %509 = vmatprep.subr.bf16.mxu0 0
      %510 = vmatpush1.bf16.msra.mxu0 0
      %511 = vmatprep.subr.bf16.mxu0 0
      %512 = vmatpush1.bf16.msra.mxu0 0
      %513 = vmatprep.subr.bf16.mxu0 0
      %514 = vmatpush1.bf16.msra.mxu0 0
      %515 = vmatprep.subr.bf16.mxu0 0
      %516 = vmatpush1.bf16.msra.mxu0 0
      %517 = vmatprep.subr.bf16.mxu0 0
      %518 = vmatpush1.bf16.msra.mxu0 0
      %519 = vmatprep.subr.bf16.mxu0 0
      %520 = vmatpush1.bf16.msra.mxu0 0
      %521 = vmatprep.subr.bf16.mxu0 0
      %522 = vmatpush1.bf16.msra.mxu0 0
      %523 = vmatprep.subr.bf16.mxu0 0
      %524 = vmatpush1.bf16.msra.mxu0 0
      %525 = vmatprep.subr.bf16.mxu0 0
      %526 = vmatpush1.bf16.msra.mxu0 0
      %527 = vmatprep.mubr.bf16.mxu0 0
      %528 = vmatmul.mubr.bf16.gmra.mrb[0].mxu0 %v345
      %v529 = vpop.f32.mrb[0].mxu0
      %v530 = vadd.f32 %v492, %v529
      %v531 = vpop.f32.mrb[0].mxu0
      %v532 = vpop.f32.mrb[0].mxu0
      %v533 = vadd.f32 %v493, %v532
      %v534 = vpop.f32.mrb[0].mxu0
      %535 = vdwg.mxu0
      %v536 = vld [vmem:[%s4] sm:$0xff]
      %v537 = vld [vmem:[%s4 + $0x8] sm:$0xff]
      %v538 = vld [vmem:[%s4 + $0x10] sm:$0xff]
      %v539 = vld [vmem:[%s4 + $0x18] sm:$0xff]
      %v540 = vld [vmem:[%s4 + $0x20] sm:$0xff]
      %v541 = vld [vmem:[%s4 + $0x28] sm:$0xff]
      %v542 = vld [vmem:[%s4 + $0x30] sm:$0xff]
      %v543 = vld [vmem:[%s4 + $0x38] sm:$0xff]
      %v544 = vld [vmem:[%s4 + $0x40] sm:$0xff]
      %v545 = vld [vmem:[%s4 + $0x48] sm:$0xff]
      %v546 = vld [vmem:[%s4 + $0x50] sm:$0xff]
      %v547 = vld [vmem:[%s4 + $0x58] sm:$0xff]
      %v548 = vld [vmem:[%s4 + $0x60] sm:$0xff]
      %v549 = vld [vmem:[%s4 + $0x68] sm:$0xff]
      %v550 = vld [vmem:[%s4 + $0x70] sm:$0xff]
      %v551 = vld [vmem:[%s4 + $0x78] sm:$0xff]
      %v552 = vld [vmem:[%s5 + $0x1] sm:$0x1]
      %v553 = vlaneseq
      %v554 = vshrl.u32 %v553, 7
      %v555 = vsub.s32 0, %v554
      %v556 = vrot.slane %v552, %v555
      %557 = vmatprep.subr.mxu0 0.0
      %558 = vmatpush1.msra.mxu0 %v536
      %559 = vmatprep.subr.mxu0 0.0
      %560 = vmatpush1.msra.mxu0 %v537
      %561 = vmatprep.subr.mxu0 0.0
      %562 = vmatpush1.msra.mxu0 %v538
      %563 = vmatprep.subr.mxu0 0.0
      %564 = vmatpush1.msra.mxu0 %v539
      %565 = vmatprep.subr.mxu0 0.0
      %566 = vmatpush1.msra.mxu0 %v540
      %567 = vmatprep.subr.mxu0 0.0
      %568 = vmatpush1.msra.mxu0 %v541
      %569 = vmatprep.subr.mxu0 0.0
      %570 = vmatpush1.msra.mxu0 %v542
      %571 = vmatprep.subr.mxu0 0.0
      %572 = vmatpush1.msra.mxu0 %v543
      %573 = vmatprep.subr.mxu0 0.0
      %574 = vmatpush1.msra.mxu0 %v544
      %575 = vmatprep.subr.mxu0 0.0
      %576 = vmatpush1.msra.mxu0 %v545
      %577 = vmatprep.subr.mxu0 0.0
      %578 = vmatpush1.msra.mxu0 %v546
      %579 = vmatprep.subr.mxu0 0.0
      %580 = vmatpush1.msra.mxu0 %v547
      %581 = vmatprep.subr.mxu0 0.0
      %582 = vmatpush1.msra.mxu0 %v548
      %583 = vmatprep.subr.mxu0 0.0
      %584 = vmatpush1.msra.mxu0 %v549
      %585 = vmatprep.subr.mxu0 0.0
      %586 = vmatpush1.msra.mxu0 %v550
      %587 = vmatprep.subr.mxu0 0.0
      %588 = vmatpush1.msra.mxu0 %v551
      %589 = vmatprep.subr.mxu0 0.0
      %590 = vmatpush1.msra.mxu0 0.0
      %591 = vmatprep.subr.mxu0 0.0
      %592 = vmatpush1.msra.mxu0 0.0
      %593 = vmatprep.subr.mxu0 0.0
      %594 = vmatpush1.msra.mxu0 0.0
      %595 = vmatprep.subr.mxu0 0.0
      %596 = vmatpush1.msra.mxu0 0.0
      %597 = vmatprep.subr.mxu0 0.0
      %598 = vmatpush1.msra.mxu0 0.0
      %599 = vmatprep.subr.mxu0 0.0
      %600 = vmatpush1.msra.mxu0 0.0
      %601 = vmatprep.subr.mxu0 0.0
      %602 = vmatpush1.msra.mxu0 0.0
      %603 = vmatprep.subr.mxu0 0.0
      %604 = vmatpush1.msra.mxu0 0.0
      %605 = vmatprep.subr.mxu0 0.0
      %606 = vmatpush1.msra.mxu0 0.0
      %607 = vmatprep.subr.mxu0 0.0
      %608 = vmatpush1.msra.mxu0 0.0
      %609 = vmatprep.subr.mxu0 0.0
      %610 = vmatpush1.msra.mxu0 0.0
      %611 = vmatprep.subr.mxu0 0.0
      %612 = vmatpush1.msra.mxu0 0.0
      %613 = vmatprep.subr.mxu0 0.0
      %614 = vmatpush1.msra.mxu0 0.0
      %615 = vmatprep.subr.mxu0 0.0
      %616 = vmatpush1.msra.mxu0 0.0
      %617 = vmatprep.subr.mxu0 0.0
      %618 = vmatpush1.msra.mxu0 0.0
      %619 = vmatprep.subr.mxu0 0.0
      %620 = vmatpush1.msra.mxu0 0.0
      %621 = vmatprep.mubr.f32.mxu0 0.0
      %622 = vmatmul.mubr.f32.gmra.mrb[0].mxu0 %v530
      %v623 = vpop.f32.mrb[0].mxu0
      %v624 = vadd.f32 %v556, %v623
      %v625 = vpop.f32.mrb[0].mxu0
      %626 = vmatprep.mubr.f32.mxu0 0.0
      %627 = vmatmul.mubr.f32.gmra.mrb[0].mxu0 %v533
      %v628 = vpop.f32.mrb[0].mxu0
      %v629 = vadd.f32 %v556, %v628
      %v630 = vpop.f32.mrb[0].mxu0
      %631 = vdwg.mxu0
      %v632 = vmul.f32 %v624, %v483
      %v633 = vmul.f32 %v629, %v488
      %v634 = vtanh.pop %v632
      %v635 = vtanh.pop %v633
      %v636 = vadd.f32 %v492, %v634
      %v637 = vadd.f32 %v493, %v635
      %v638 = vpack.c.bf16 %v635, %v634
      %639 = vmatprep.subr.bf16.mxu0 0
      %640 = vmatpush1.bf16.msra.mxu0 %v638
      %641 = vmatprep.subr.bf16.mxu0 0
      %642 = vmatpush1.bf16.msra.mxu0 0
      %643 = vmatprep.subr.bf16.mxu0 0
      %644 = vmatpush1.bf16.msra.mxu0 0
      %645 = vmatprep.subr.bf16.mxu0 0
      %646 = vmatpush1.bf16.msra.mxu0 0
      %647 = vmatprep.subr.bf16.mxu0 0
      %648 = vmatpush1.bf16.msra.mxu0 0
      %649 = vmatprep.subr.bf16.mxu0 0
      %650 = vmatpush1.bf16.msra.mxu0 0
      %651 = vmatprep.subr.bf16.mxu0 0
      %652 = vmatpush1.bf16.msra.mxu0 0
      %653 = vmatprep.subr.bf16.mxu0 0
      %654 = vmatpush1.bf16.msra.mxu0 0
      %655 = vmatprep.subr.bf16.mxu0 0
      %656 = vmatpush1.bf16.msra.mxu0 0
      %657 = vmatprep.subr.bf16.mxu0 0
      %658 = vmatpush1.bf16.msra.mxu0 0
      %659 = vmatprep.subr.bf16.mxu0 0
      %660 = vmatpush1.bf16.msra.mxu0 0
      %661 = vmatprep.subr.bf16.mxu0 0
      %662 = vmatpush1.bf16.msra.mxu0 0
      %663 = vmatprep.subr.bf16.mxu0 0
      %664 = vmatpush1.bf16.msra.mxu0 0
      %665 = vmatprep.subr.bf16.mxu0 0
      %666 = vmatpush1.bf16.msra.mxu0 0
      %667 = vmatprep.subr.bf16.mxu0 0
      %668 = vmatpush1.bf16.msra.mxu0 0
      %669 = vmatprep.subr.bf16.mxu0 0
      %670 = vmatpush1.bf16.msra.mxu0 0
      %671 = vmatprep.mubr.bf16.mxu0 0
      %672 = vmatmul.mubr.bf16.gmra.mrb[0].mxu0 %v345
      %v673 = vpop.f32.mrb[0].mxu0
      %v674 = vadd.f32 %v634, %v673
      %v675 = vpop.f32.mrb[0].mxu0
      %v676 = vpop.f32.mrb[0].mxu0
      %v677 = vadd.f32 %v635, %v676
      %v678 = vpop.f32.mrb[0].mxu0
      %679 = vdwg.mxu0
      %s680 = scalar_lea.vmem %s4, 128
      %v681 = vld [vmem:[%s680] sm:$0xff]
      %v682 = vld [vmem:[%s680 + $0x8] sm:$0xff]
      %v683 = vld [vmem:[%s680 + $0x10] sm:$0xff]
      %v684 = vld [vmem:[%s680 + $0x18] sm:$0xff]
      %v685 = vld [vmem:[%s680 + $0x20] sm:$0xff]
      %v686 = vld [vmem:[%s680 + $0x28] sm:$0xff]
      %v687 = vld [vmem:[%s680 + $0x30] sm:$0xff]
      %v688 = vld [vmem:[%s680 + $0x38] sm:$0xff]
      %v689 = vld [vmem:[%s680 + $0x40] sm:$0xff]
      %v690 = vld [vmem:[%s680 + $0x48] sm:$0xff]
      %v691 = vld [vmem:[%s680 + $0x50] sm:$0xff]
      %v692 = vld [vmem:[%s680 + $0x58] sm:$0xff]
      %v693 = vld [vmem:[%s680 + $0x60] sm:$0xff]
      %v694 = vld [vmem:[%s680 + $0x68] sm:$0xff]
      %v695 = vld [vmem:[%s680 + $0x70] sm:$0xff]
      %v696 = vld [vmem:[%s680 + $0x78] sm:$0xff]
      %v697 = vld [vmem:[%s5 + $0x2] sm:$0x1]
      %v698 = vlaneseq
      %v699 = vshrl.u32 %v698, 7
      %v700 = vsub.s32 0, %v699
      %v701 = vrot.slane %v697, %v700
      %702 = vmatprep.subr.mxu0 0.0
      %703 = vmatpush1.msra.mxu0 %v681
      %704 = vmatprep.subr.mxu0 0.0
      %705 = vmatpush1.msra.mxu0 %v682
      %706 = vmatprep.subr.mxu0 0.0
      %707 = vmatpush1.msra.mxu0 %v683
      %708 = vmatprep.subr.mxu0 0.0
      %709 = vmatpush1.msra.mxu0 %v684
      %710 = vmatprep.subr.mxu0 0.0
      %711 = vmatpush1.msra.mxu0 %v685
      %712 = vmatprep.subr.mxu0 0.0
      %713 = vmatpush1.msra.mxu0 %v686
      %714 = vmatprep.subr.mxu0 0.0
      %715 = vmatpush1.msra.mxu0 %v687
      %716 = vmatprep.subr.mxu0 0.0
      %717 = vmatpush1.msra.mxu0 %v688
      %718 = vmatprep.subr.mxu0 0.0
      %719 = vmatpush1.msra.mxu0 %v689
      %720 = vmatprep.subr.mxu0 0.0
      %721 = vmatpush1.msra.mxu0 %v690
      %722 = vmatprep.subr.mxu0 0.0
      %723 = vmatpush1.msra.mxu0 %v691
      %724 = vmatprep.subr.mxu0 0.0
      %725 = vmatpush1.msra.mxu0 %v692
      %726 = vmatprep.subr.mxu0 0.0
      %727 = vmatpush1.msra.mxu0 %v693
      %728 = vmatprep.subr.mxu0 0.0
      %729 = vmatpush1.msra.mxu0 %v694
      %730 = vmatprep.subr.mxu0 0.0
      %731 = vmatpush1.msra.mxu0 %v695
      %732 = vmatprep.subr.mxu0 0.0
      %733 = vmatpush1.msra.mxu0 %v696
      %734 = vmatprep.subr.mxu0 0.0
      %735 = vmatpush1.msra.mxu0 0.0
      %736 = vmatprep.subr.mxu0 0.0
      %737 = vmatpush1.msra.mxu0 0.0
      %738 = vmatprep.subr.mxu0 0.0
      %739 = vmatpush1.msra.mxu0 0.0
      %740 = vmatprep.subr.mxu0 0.0
      %741 = vmatpush1.msra.mxu0 0.0
      %742 = vmatprep.subr.mxu0 0.0
      %743 = vmatpush1.msra.mxu0 0.0
      %744 = vmatprep.subr.mxu0 0.0
      %745 = vmatpush1.msra.mxu0 0.0
      %746 = vmatprep.subr.mxu0 0.0
      %747 = vmatpush1.msra.mxu0 0.0
      %748 = vmatprep.subr.mxu0 0.0
      %749 = vmatpush1.msra.mxu0 0.0
      %750 = vmatprep.subr.mxu0 0.0
      %751 = vmatpush1.msra.mxu0 0.0
      %752 = vmatprep.subr.mxu0 0.0
      %753 = vmatpush1.msra.mxu0 0.0
      %754 = vmatprep.subr.mxu0 0.0
      %755 = vmatpush1.msra.mxu0 0.0
      %756 = vmatprep.subr.mxu0 0.0
      %757 = vmatpush1.msra.mxu0 0.0
      %758 = vmatprep.subr.mxu0 0.0
      %759 = vmatpush1.msra.mxu0 0.0
      %760 = vmatprep.subr.mxu0 0.0
      %761 = vmatpush1.msra.mxu0 0.0
      %762 = vmatprep.subr.mxu0 0.0
      %763 = vmatpush1.msra.mxu0 0.0
      %764 = vmatprep.subr.mxu0 0.0
      %765 = vmatpush1.msra.mxu0 0.0
      %766 = vmatprep.mubr.f32.mxu0 0.0
      %767 = vmatmul.mubr.f32.gmra.mrb[0].mxu0 %v674
      %v768 = vpop.f32.mrb[0].mxu0
      %v769 = vadd.f32 %v701, %v768
      %v770 = vpop.f32.mrb[0].mxu0
      %771 = vmatprep.mubr.f32.mxu0 0.0
      %772 = vmatmul.mubr.f32.gmra.mrb[0].mxu0 %v677
      %v773 = vpop.f32.mrb[0].mxu0
      %v774 = vadd.f32 %v701, %v773
      %v775 = vpop.f32.mrb[0].mxu0
      %776 = vdwg.mxu0
      %v777 = vmul.f32 %v769, %v483
      %v778 = vmul.f32 %v774, %v488
      %v779 = vtanh.pop %v777
      %v780 = vtanh.pop %v778
      %v781 = vadd.f32 %v636, %v779
      %v782 = vadd.f32 %v637, %v780
      %v783 = vpack.c.bf16 %v780, %v779
      %784 = vmatprep.subr.bf16.mxu0 0
      %785 = vmatpush1.bf16.msra.mxu0 %v783
      %786 = vmatprep.subr.bf16.mxu0 0
      %787 = vmatpush1.bf16.msra.mxu0 0
      %788 = vmatprep.subr.bf16.mxu0 0
      %789 = vmatpush1.bf16.msra.mxu0 0
      %790 = vmatprep.subr.bf16.mxu0 0
      %791 = vmatpush1.bf16.msra.mxu0 0
      %792 = vmatprep.subr.bf16.mxu0 0
      %793 = vmatpush1.bf16.msra.mxu0 0
      %794 = vmatprep.subr.bf16.mxu0 0
      %795 = vmatpush1.bf16.msra.mxu0 0
      %796 = vmatprep.subr.bf16.mxu0 0
      %797 = vmatpush1.bf16.msra.mxu0 0
      %798 = vmatprep.subr.bf16.mxu0 0
      %799 = vmatpush1.bf16.msra.mxu0 0
      %800 = vmatprep.subr.bf16.mxu0 0
      %801 = vmatpush1.bf16.msra.mxu0 0
      %802 = vmatprep.subr.bf16.mxu0 0
      %803 = vmatpush1.bf16.msra.mxu0 0
      %804 = vmatprep.subr.bf16.mxu0 0
      %805 = vmatpush1.bf16.msra.mxu0 0
      %806 = vmatprep.subr.bf16.mxu0 0
      %807 = vmatpush1.bf16.msra.mxu0 0
      %808 = vmatprep.subr.bf16.mxu0 0
      %809 = vmatpush1.bf16.msra.mxu0 0
      %810 = vmatprep.subr.bf16.mxu0 0
      %811 = vmatpush1.bf16.msra.mxu0 0
      %812 = vmatprep.subr.bf16.mxu0 0
      %813 = vmatpush1.bf16.msra.mxu0 0
      %814 = vmatprep.subr.bf16.mxu0 0
      %815 = vmatpush1.bf16.msra.mxu0 0
      %816 = vmatprep.mubr.bf16.mxu0 0
      %817 = vmatmul.mubr.bf16.gmra.mrb[0].mxu0 %v345
      %v818 = vpop.f32.mrb[0].mxu0
      %v819 = vadd.f32 %v779, %v818
      %v820 = vpop.f32.mrb[0].mxu0
      %v821 = vpop.f32.mrb[0].mxu0
      %v822 = vadd.f32 %v780, %v821
      %v823 = vpop.f32.mrb[0].mxu0
      %824 = vdwg.mxu0
      %s825 = scalar_lea.vmem %s4, 256
      %v826 = vld [vmem:[%s825] sm:$0xff]
      %v827 = vld [vmem:[%s825 + $0x8] sm:$0xff]
      %v828 = vld [vmem:[%s825 + $0x10] sm:$0xff]
      %v829 = vld [vmem:[%s825 + $0x18] sm:$0xff]
      %v830 = vld [vmem:[%s825 + $0x20] sm:$0xff]
      %v831 = vld [vmem:[%s825 + $0x28] sm:$0xff]
      %v832 = vld [vmem:[%s825 + $0x30] sm:$0xff]
      %v833 = vld [vmem:[%s825 + $0x38] sm:$0xff]
      %v834 = vld [vmem:[%s825 + $0x40] sm:$0xff]
      %v835 = vld [vmem:[%s825 + $0x48] sm:$0xff]
      %v836 = vld [vmem:[%s825 + $0x50] sm:$0xff]
      %v837 = vld [vmem:[%s825 + $0x58] sm:$0xff]
      %v838 = vld [vmem:[%s825 + $0x60] sm:$0xff]
      %v839 = vld [vmem:[%s825 + $0x68] sm:$0xff]
      %v840 = vld [vmem:[%s825 + $0x70] sm:$0xff]
      %v841 = vld [vmem:[%s825 + $0x78] sm:$0xff]
      %v842 = vld [vmem:[%s5 + $0x3] sm:$0x1]
      %v843 = vlaneseq
      %v844 = vshrl.u32 %v843, 7
      %v845 = vsub.s32 0, %v844
      %v846 = vrot.slane %v842, %v845
      %847 = vmatprep.subr.mxu0 0.0
      %848 = vmatpush1.msra.mxu0 %v826
      %849 = vmatprep.subr.mxu0 0.0
      %850 = vmatpush1.msra.mxu0 %v827
      %851 = vmatprep.subr.mxu0 0.0
      %852 = vmatpush1.msra.mxu0 %v828
      %853 = vmatprep.subr.mxu0 0.0
      %854 = vmatpush1.msra.mxu0 %v829
      %855 = vmatprep.subr.mxu0 0.0
      %856 = vmatpush1.msra.mxu0 %v830
      %857 = vmatprep.subr.mxu0 0.0
      %858 = vmatpush1.msra.mxu0 %v831
      %859 = vmatprep.subr.mxu0 0.0
      %860 = vmatpush1.msra.mxu0 %v832
      %861 = vmatprep.subr.mxu0 0.0
      %862 = vmatpush1.msra.mxu0 %v833
      %863 = vmatprep.subr.mxu0 0.0
      %864 = vmatpush1.msra.mxu0 %v834
      %865 = vmatprep.subr.mxu0 0.0
      %866 = vmatpush1.msra.mxu0 %v835
      %867 = vmatprep.subr.mxu0 0.0
      %868 = vmatpush1.msra.mxu0 %v836
      %869 = vmatprep.subr.mxu0 0.0
      %870 = vmatpush1.msra.mxu0 %v837
      %871 = vmatprep.subr.mxu0 0.0
      %872 = vmatpush1.msra.mxu0 %v838
      %873 = vmatprep.subr.mxu0 0.0
      %874 = vmatpush1.msra.mxu0 %v839
      %875 = vmatprep.subr.mxu0 0.0
      %876 = vmatpush1.msra.mxu0 %v840
      %877 = vmatprep.subr.mxu0 0.0
      %878 = vmatpush1.msra.mxu0 %v841
      %879 = vmatprep.subr.mxu0 0.0
      %880 = vmatpush1.msra.mxu0 0.0
      %881 = vmatprep.subr.mxu0 0.0
      %882 = vmatpush1.msra.mxu0 0.0
      %883 = vmatprep.subr.mxu0 0.0
      %884 = vmatpush1.msra.mxu0 0.0
      %885 = vmatprep.subr.mxu0 0.0
      %886 = vmatpush1.msra.mxu0 0.0
      %887 = vmatprep.subr.mxu0 0.0
      %888 = vmatpush1.msra.mxu0 0.0
      %889 = vmatprep.subr.mxu0 0.0
      %890 = vmatpush1.msra.mxu0 0.0
      %891 = vmatprep.subr.mxu0 0.0
      %892 = vmatpush1.msra.mxu0 0.0
      %893 = vmatprep.subr.mxu0 0.0
      %894 = vmatpush1.msra.mxu0 0.0
      %895 = vmatprep.subr.mxu0 0.0
      %896 = vmatpush1.msra.mxu0 0.0
      %897 = vmatprep.subr.mxu0 0.0
      %898 = vmatpush1.msra.mxu0 0.0
      %899 = vmatprep.subr.mxu0 0.0
      %900 = vmatpush1.msra.mxu0 0.0
      %901 = vmatprep.subr.mxu0 0.0
      %902 = vmatpush1.msra.mxu0 0.0
      %903 = vmatprep.subr.mxu0 0.0
      %904 = vmatpush1.msra.mxu0 0.0
      %905 = vmatprep.subr.mxu0 0.0
      %906 = vmatpush1.msra.mxu0 0.0
      %907 = vmatprep.subr.mxu0 0.0
      %908 = vmatpush1.msra.mxu0 0.0
      %909 = vmatprep.subr.mxu0 0.0
      %910 = vmatpush1.msra.mxu0 0.0
      %911 = vmatprep.mubr.f32.mxu0 0.0
      %912 = vmatmul.mubr.f32.gmra.mrb[0].mxu0 %v819
      %v913 = vpop.f32.mrb[0].mxu0
      %v914 = vadd.f32 %v846, %v913
      %v915 = vpop.f32.mrb[0].mxu0
      %916 = vmatprep.mubr.f32.mxu0 0.0
      %917 = vmatmul.mubr.f32.gmra.mrb[0].mxu0 %v822
      %v918 = vpop.f32.mrb[0].mxu0
      %v919 = vadd.f32 %v846, %v918
      %v920 = vpop.f32.mrb[0].mxu0
      %921 = vdwg.mxu0
      %v922 = vmul.f32 %v914, %v483
      %v923 = vmul.f32 %v919, %v488
      %v924 = vtanh.pop %v922
      %v925 = vtanh.pop %v923
      %v926 = vadd.f32 %v781, %v924
      %v927 = vadd.f32 %v782, %v925
      %v928 = vpack.c.bf16 %v927, %v926
      %v930 = vunpack.c.l.b16 %v928
      %v931 = vunpack.c.h.b16 %v928
      %v932 = vpack.c.b16 %v930, %v930
      %v933 = vpack.c.b16 %v931, %v931
      %936 = vst [vmem:[%s325] sm:$0xf] %v932
      %937 = vst [vmem:[%s325 + $0x4] sm:$0xf] %v933
      %v938 = vadd.f32 %v926, %v927
      %v939 = vrot.slane %v938, 4
      %v940 = vadd.f32 %v938, %v939
      %v941 = vrot.slane %v940, 2
      %v942 = vadd.f32 %v940, %v941
      %v943 = vrot.slane %v942, 1
      %v944 = vadd.f32 %v942, %v943
      %v945 = vmul.f32 %v926, %v926
      %v946 = vmul.f32 %v927, %v927
      %v947 = vadd.f32 %v945, %v946
      %v948 = vrot.slane %v947, 4
      %v949 = vadd.f32 %v947, %v948
      %v950 = vrot.slane %v949, 2
      %v951 = vadd.f32 %v949, %v950
      %v952 = vrot.slane %v951, 1
      %v953 = vadd.f32 %v951, %v952
      %vm954 = vcmask 1040384
      %v955 = vsel %vm954, %v944, %v953
      %956 = vst [vmem:[%s329] sm:$0x3] %v955
      %p957 = scmp.lt.s32.totalorder %s19, 1
      %s958 = scalar_select %p957, %s19, 1
      %s959 = smul.addr %s958, 2
      %s960 = smul.addr %s959, 4
      %s961 = scalar_lea.vmem %s6, %s960
      %p962 = scmp.lt.s32.totalorder %s19, 1
      %s963 = scalar_select %p962, %s19, 1
      %s964 = smul.addr %s963, 2
      %s965 = scalar_lea.vmem %s7, %s964
      // Predicated region
      $region45: #{fast_att_pool_forward.2} parent=43 // pred_check
        %p966 = pneg %p178
      $region46: #{fast_att_pool_forward.2} parent=43 // pred_check_branch
        %968 = sbr.rel (%p966) target = $region48
      $region47: #{fast_att_pool_forward.2} parent=43 // pred_region
        _
      $region48: #{fast_att_pool_forward.2} parent=43 // pred_fallthru
        _
      // Predicated region
      $region49: #{fast_att_pool_forward.2} parent=43 // pred_check
        %p969 = pneg %p204
      $region50: #{fast_att_pool_forward.2} parent=43 // pred_check_branch
        %971 = sbr.rel (%p969) target = $region52
      $region51: #{fast_att_pool_forward.2} parent=43 // pred_region
        _
      $region52: #{fast_att_pool_forward.2} parent=43 // pred_fallthru
        _
    $region44: #{fast_att_pool_forward.2} parent=5 // pred_fallthru
      _
    %p972 = scmp.le.s32.totalorder 2, %s14
    // Predicated region
    $region53: #{fast_att_pool_forward.2} parent=5 // pred_check
      %p973 = pneg %p972
    $region54: #{fast_att_pool_forward.2} parent=5 // pred_check_branch
      %975 = sbr.rel (%p973) target = $region56
    $region55: #{fast_att_pool_forward.2} parent=5 // pred_region
      %s976 = ssub.s32 %s14, 2
      // Predicated region
      $region57: #{fast_att_pool_forward.2} parent=55 // pred_check
        %p977 = pneg %p184
      $region58: #{fast_att_pool_forward.2} parent=55 // pred_check_branch
        %979 = sbr.rel (%p977) target = $region60
      $region59: #{fast_att_pool_forward.2} parent=55 // pred_region
        %p980 = scmp.lt.s32.totalorder %s20, 1
        %s981 = scalar_select %p980, %s20, 1
        %s982 = smul.addr %s981, 2
        %s983 = smul.addr %s982, 4
        %s984 = scalar_lea.vmem %s6, %s983
      $region60: #{fast_att_pool_forward.2} parent=55 // pred_fallthru
        _
      // Predicated region
      $region61: #{fast_att_pool_forward.2} parent=55 // pred_check
        %p985 = pneg %p210
      $region62: #{fast_att_pool_forward.2} parent=55 // pred_check_branch
        %987 = sbr.rel (%p985) target = $region64
      $region63: #{fast_att_pool_forward.2} parent=55 // pred_region
        %p988 = scmp.lt.s32.totalorder %s20, 1
        %s989 = scalar_select %p988, %s20, 1
        %s990 = smul.addr %s989, 2
        %s991 = scalar_lea.vmem %s7, %s990
      $region64: #{fast_att_pool_forward.2} parent=55 // pred_fallthru
        _
    $region56: #{fast_att_pool_forward.2} parent=5 // pred_fallthru
      _
  $region6: #{fast_att_pool_forward.2} parent=0 // loop_footer
    %s18 = sadd.s32 1, %s14
  $region7: #{fast_att_pool_forward.2} parent=0 // loop_footer_branch
    %13 = sbr.rel target = $region3
  $region8: #{fast_att_pool_forward.2} parent=0 // loop_exit
    _

// kernel: fast_att_pool_forward.3
$region0: #{fast_att_pool_forward.3}
  #allocation0 [shape = 'u32[]', space=smem, size = 0x4, offset = 0x4, fixed_abs, tag = 'smem constant byte address 0x4 - core index']
  #allocation1 [shape = 'u32[144,128]{1,0:T(1,128)}', space=vmem, size = 0x12000, scoped, tag = 'internal scratch']
  %s0 = inlined_call_operand.vmem [shape: bf16[2,16,128], index: 0, kind: input, shape index: {}]
  %s1 = inlined_call_operand.vmem [shape: f32[1,128], index: 1, kind: input, shape index: {}]
  %s2 = inlined_call_operand.vmem [shape: f32[1,128], index: 2, kind: input, shape index: {}]
  %s3 = inlined_call_operand.vmem [shape: f32[128,128], index: 3, kind: input, shape index: {}]
  %s4 = inlined_call_operand.vmem [shape: f32[1,128], index: 4, kind: input, shape index: {}]
  %s5 = inlined_call_operand.vmem [shape: f32[256,8], index: 5, kind: input, shape index: {}]
  %s6 = inlined_call_operand.vmem [shape: f32[1,8], index: 6, kind: input, shape index: {}]
  %s7 = inlined_call_operand.hbm [shape: f32[2,1,8], index: 7, kind: output, shape index: {}]
  %s8 = sld [smem:[#allocation0]]
  $region61: #{fast_att_pool_forward.3} parent=0
    _
  %s10 = ssub.s32 1, %s8
  %s11 = scalar_select 0, %s10, %s8
  $region1: #{fast_att_pool_forward.3} parent=0
    #allocation2 [shape = 'u8[1024]{0}', space=vmem, size = 0x400, scoped, tag = 'output window, operand 0']
    #allocation3 [shape = 's32[2]{0}', space=sflag, size = 0x8, scoped, tag = 'scoped memory for fast_att_pool_forward.3']
    %12 = vsyncpa [#allocation3], 0
    %s13 = scalar_lea.sflag [#allocation3], 1
    %14 = vsyncpa %s13, 0
    loop: start=0, step=1, limit=4
    $region2: #{fast_att_pool_forward.3} parent=1 // loop_pre_header
      _
    $region3: #{fast_att_pool_forward.3} parent=1 // loop_header
      %s16 = sphi 0, %s20
      %p17 = scmp.ge.s32.totalorder %s16, 4
      %s26 = sphi 0, %s28
      %s29 = sphi 0, %s26
      %s30 = sphi 0, %s29
      %s46 = sphi 0, %s30
      %s50 = sphi 0, %s50
      %s52 = sphi 0, %s50
      %s53 = sphi 0, %s52
      %s67 = sphi 0, %s53
      %s71 = sphi 0, %s71
      %s73 = sphi 0, %s71
      %s74 = sphi 0, %s73
      %s88 = sphi 0, %s74
      %s92 = sphi 0, %s92
      %s94 = sphi 0, %s92
      %s95 = sphi 0, %s94
      %s109 = sphi 0, %s95
      %s113 = sphi 0, %s113
      %s115 = sphi 0, %s113
      %s116 = sphi 0, %s115
      %s130 = sphi 0, %s116
      %s134 = sphi 0, %s134
      %s136 = sphi 0, %s134
      %s137 = sphi 0, %s136
      %s151 = sphi 0, %s137
      %s155 = sphi 0, %s155
      %s157 = sphi 0, %s155
      %s158 = sphi 0, %s157
      %s172 = sphi 0, %s158
      %s178 = sphi 0, %s180
      %s181 = sphi 0, %s178
      %s182 = sphi 0, %s181
      %s198 = sphi 0, %s182
    $region4: #{fast_att_pool_forward.3} parent=1 // loop_header_branch
      %19 = sbr.rel (%p17) target = $region8
    $region5: #{fast_att_pool_forward.3} parent=1 // loop_body
      %s21 = ssub.s32 %s16, 1
      %s22 = ssub.s32 %s16, 2
      %s23 = sadd.s32 %s16, 1
      %s24 = ssub.s32 %s16, %s23
      %p25 = scmp.eq.s32.totalorder %s24, 0
      %s27 = sadd.s32 %s26, 1
      %s28 = scalar_select %p25, %s26, %s27
      %p31 = pneg %p25
      %p32 = scmp.eq.s32.totalorder %s16, 1
      %p33 = por %p31, %p32
      %p34 = scmp.ne.s32.totalorder %s26, %s29
      %p35 = scmp.eq.s32.totalorder %s16, 0
      %p36 = por %p34, %p35
      %p37 = scmp.ne.s32.totalorder %s26, %s29
      %p38 = scmp.eq.s32.totalorder %s21, 1
      %p39 = por %p37, %p38
      %p40 = scmp.ne.s32.totalorder %s29, %s30
      %p41 = scmp.eq.s32.totalorder %s21, 0
      %p42 = por %p40, %p41
      %p43 = scmp.ne.s32.totalorder %s29, %s30
      %p44 = scmp.eq.s32.totalorder %s22, 1
      %p45 = por %p43, %p44
      %p47 = scmp.ne.s32.totalorder %s30, %s46
      %p48 = scmp.eq.s32.totalorder %s22, 0
      %p49 = por %p47, %p48
      %s51 = sadd.s32 %s50, 1
      %p54 = scmp.eq.s32.totalorder %s16, 1
      %p55 = scmp.ne.s32.totalorder %s50, %s52
      %p56 = scmp.eq.s32.totalorder %s16, 0
      %p57 = por %p55, %p56
      %p58 = scmp.ne.s32.totalorder %s50, %s52
      %p59 = scmp.eq.s32.totalorder %s21, 1
      %p60 = por %p58, %p59
      %p61 = scmp.ne.s32.totalorder %s52, %s53
      %p62 = scmp.eq.s32.totalorder %s21, 0
      %p63 = por %p61, %p62
      %p64 = scmp.ne.s32.totalorder %s52, %s53
      %p65 = scmp.eq.s32.totalorder %s22, 1
      %p66 = por %p64, %p65
      %p68 = scmp.ne.s32.totalorder %s53, %s67
      %p69 = scmp.eq.s32.totalorder %s22, 0
      %p70 = por %p68, %p69
      %s72 = sadd.s32 %s71, 1
      %p75 = scmp.eq.s32.totalorder %s16, 1
      %p76 = scmp.ne.s32.totalorder %s71, %s73
      %p77 = scmp.eq.s32.totalorder %s16, 0
      %p78 = por %p76, %p77
      %p79 = scmp.ne.s32.totalorder %s71, %s73
      %p80 = scmp.eq.s32.totalorder %s21, 1
      %p81 = por %p79, %p80
      %p82 = scmp.ne.s32.totalorder %s73, %s74
      %p83 = scmp.eq.s32.totalorder %s21, 0
      %p84 = por %p82, %p83
      %p85 = scmp.ne.s32.totalorder %s73, %s74
      %p86 = scmp.eq.s32.totalorder %s22, 1
      %p87 = por %p85, %p86
      %p89 = scmp.ne.s32.totalorder %s74, %s88
      %p90 = scmp.eq.s32.totalorder %s22, 0
      %p91 = por %p89, %p90
      %s93 = sadd.s32 %s92, 1
      %p96 = scmp.eq.s32.totalorder %s16, 1
      %p97 = scmp.ne.s32.totalorder %s92, %s94
      %p98 = scmp.eq.s32.totalorder %s16, 0
      %p99 = por %p97, %p98
      %p100 = scmp.ne.s32.totalorder %s92, %s94
      %p101 = scmp.eq.s32.totalorder %s21, 1
      %p102 = por %p100, %p101
      %p103 = scmp.ne.s32.totalorder %s94, %s95
      %p104 = scmp.eq.s32.totalorder %s21, 0
      %p105 = por %p103, %p104
      %p106 = scmp.ne.s32.totalorder %s94, %s95
      %p107 = scmp.eq.s32.totalorder %s22, 1
      %p108 = por %p106, %p107
      %p110 = scmp.ne.s32.totalorder %s95, %s109
      %p111 = scmp.eq.s32.totalorder %s22, 0
      %p112 = por %p110, %p111
      %s114 = sadd.s32 %s113, 1
      %p117 = scmp.eq.s32.totalorder %s16, 1
      %p118 = scmp.ne.s32.totalorder %s113, %s115
      %p119 = scmp.eq.s32.totalorder %s16, 0
      %p120 = por %p118, %p119
      %p121 = scmp.ne.s32.totalorder %s113, %s115
      %p122 = scmp.eq.s32.totalorder %s21, 1
      %p123 = por %p121, %p122
      %p124 = scmp.ne.s32.totalorder %s115, %s116
      %p125 = scmp.eq.s32.totalorder %s21, 0
      %p126 = por %p124, %p125
      %p127 = scmp.ne.s32.totalorder %s115, %s116
      %p128 = scmp.eq.s32.totalorder %s22, 1
      %p129 = por %p127, %p128
      %p131 = scmp.ne.s32.totalorder %s116, %s130
      %p132 = scmp.eq.s32.totalorder %s22, 0
      %p133 = por %p131, %p132
      %s135 = sadd.s32 %s134, 1
      %p138 = scmp.eq.s32.totalorder %s16, 1
      %p139 = scmp.ne.s32.totalorder %s134, %s136
      %p140 = scmp.eq.s32.totalorder %s16, 0
      %p141 = por %p139, %p140
      %p142 = scmp.ne.s32.totalorder %s134, %s136
      %p143 = scmp.eq.s32.totalorder %s21, 1
      %p144 = por %p142, %p143
      %p145 = scmp.ne.s32.totalorder %s136, %s137
      %p146 = scmp.eq.s32.totalorder %s21, 0
      %p147 = por %p145, %p146
      %p148 = scmp.ne.s32.totalorder %s136, %s137
      %p149 = scmp.eq.s32.totalorder %s22, 1
      %p150 = por %p148, %p149
      %p152 = scmp.ne.s32.totalorder %s137, %s151
      %p153 = scmp.eq.s32.totalorder %s22, 0
      %p154 = por %p152, %p153
      %s156 = sadd.s32 %s155, 1
      %p159 = scmp.eq.s32.totalorder %s16, 1
      %p160 = scmp.ne.s32.totalorder %s155, %s157
      %p161 = scmp.eq.s32.totalorder %s16, 0
      %p162 = por %p160, %p161
      %p163 = scmp.ne.s32.totalorder %s155, %s157
      %p164 = scmp.eq.s32.totalorder %s21, 1
      %p165 = por %p163, %p164
      %p166 = scmp.ne.s32.totalorder %s157, %s158
      %p167 = scmp.eq.s32.totalorder %s21, 0
      %p168 = por %p166, %p167
      %p169 = scmp.ne.s32.totalorder %s157, %s158
      %p170 = scmp.eq.s32.totalorder %s22, 1
      %p171 = por %p169, %p170
      %p173 = scmp.ne.s32.totalorder %s158, %s172
      %p174 = scmp.eq.s32.totalorder %s22, 0
      %p175 = por %p173, %p174
      %s176 = ssub.s32 %s16, %s23
      %p177 = scmp.eq.s32.totalorder %s176, 0
      %s179 = sadd.s32 %s178, 1
      %s180 = scalar_select %p177, %s178, %s179
      %p183 = pneg %p177
      %p184 = scmp.eq.s32.totalorder %s16, 1
      %p185 = por %p183, %p184
      %p186 = scmp.ne.s32.totalorder %s178, %s181
      %p187 = scmp.eq.s32.totalorder %s16, 0
      %p188 = por %p186, %p187
      %p189 = scmp.ne.s32.totalorder %s178, %s181
      %p190 = scmp.eq.s32.totalorder %s21, 1
      %p191 = por %p189, %p190
      %p192 = scmp.ne.s32.totalorder %s181, %s182
      %p193 = scmp.eq.s32.totalorder %s21, 0
      %p194 = por %p192, %p193
      %p195 = scmp.ne.s32.totalorder %s181, %s182
      %p196 = scmp.eq.s32.totalorder %s22, 1
      %p197 = por %p195, %p196
      %p199 = scmp.ne.s32.totalorder %s182, %s198
      %p200 = scmp.eq.s32.totalorder %s22, 0
      %p201 = por %p199, %p200
      %p202 = scmp.le.s32.totalorder 1, %s16
      %p203 = scmp.lt.s32.totalorder %s16, 3
      %p204 = pnand %p202, %p203
      %p205 = pneg %p204
      // Predicated region
      $region9: #{fast_att_pool_forward.3} parent=5 // pred_check
        _
      $region10: #{fast_att_pool_forward.3} parent=5 // pred_check_branch
        %207 = sbr.rel (%p204) target = $region12
      $region11: #{fast_att_pool_forward.3} parent=5 // pred_region
        %s208 = ssub.s32 %s16, 1
        // Predicated region
        $region13: #{fast_att_pool_forward.3} parent=11 // pred_check
          %p209 = pneg %p63
        $region14: #{fast_att_pool_forward.3} parent=11 // pred_check_branch
          %211 = sbr.rel (%p209) target = $region16
        $region15: #{fast_att_pool_forward.3} parent=11 // pred_region
          _
        $region16: #{fast_att_pool_forward.3} parent=11 // pred_fallthru
          _
        // Predicated region
        $region17: #{fast_att_pool_forward.3} parent=11 // pred_check
          %p212 = pneg %p84
        $region18: #{fast_att_pool_forward.3} parent=11 // pred_check_branch
          %214 = sbr.rel (%p212) target = $region20
        $region19: #{fast_att_pool_forward.3} parent=11 // pred_region
          _
        $region20: #{fast_att_pool_forward.3} parent=11 // pred_fallthru
          _
        // Predicated region
        $region21: #{fast_att_pool_forward.3} parent=11 // pred_check
          %p215 = pneg %p105
        $region22: #{fast_att_pool_forward.3} parent=11 // pred_check_branch
          %217 = sbr.rel (%p215) target = $region24
        $region23: #{fast_att_pool_forward.3} parent=11 // pred_region
          _
        $region24: #{fast_att_pool_forward.3} parent=11 // pred_fallthru
          _
        // Predicated region
        $region25: #{fast_att_pool_forward.3} parent=11 // pred_check
          %p218 = pneg %p126
        $region26: #{fast_att_pool_forward.3} parent=11 // pred_check_branch
          %220 = sbr.rel (%p218) target = $region28
        $region27: #{fast_att_pool_forward.3} parent=11 // pred_region
          _
        $region28: #{fast_att_pool_forward.3} parent=11 // pred_fallthru
          _
        // Predicated region
        $region29: #{fast_att_pool_forward.3} parent=11 // pred_check
          %p221 = pneg %p147
        $region30: #{fast_att_pool_forward.3} parent=11 // pred_check_branch
          %223 = sbr.rel (%p221) target = $region32
        $region31: #{fast_att_pool_forward.3} parent=11 // pred_region
          _
        $region32: #{fast_att_pool_forward.3} parent=11 // pred_fallthru
          _
        // Predicated region
        $region33: #{fast_att_pool_forward.3} parent=11 // pred_check
          %p224 = pneg %p168
        $region34: #{fast_att_pool_forward.3} parent=11 // pred_check_branch
          %226 = sbr.rel (%p224) target = $region36
        $region35: #{fast_att_pool_forward.3} parent=11 // pred_region
          _
        $region36: #{fast_att_pool_forward.3} parent=11 // pred_fallthru
          _
      $region12: #{fast_att_pool_forward.3} parent=5 // pred_fallthru
        _
      %p227 = scmp.lt.s32.totalorder %s16, 2
      // Predicated region
      $region37: #{fast_att_pool_forward.3} parent=5 // pred_check
        %p228 = pneg %p227
      $region38: #{fast_att_pool_forward.3} parent=5 // pred_check_branch
        %230 = sbr.rel (%p228) target = $region40
      $region39: #{fast_att_pool_forward.3} parent=5 // pred_region
        // Predicated region
        $region41: #{fast_att_pool_forward.3} parent=39 // pred_check
          %p231 = pneg %p36
        $region42: #{fast_att_pool_forward.3} parent=39 // pred_check_branch
          %233 = sbr.rel (%p231) target = $region44
        $region43: #{fast_att_pool_forward.3} parent=39 // pred_region
          %p234 = scmp.lt.s32.totalorder %s16, 1
          %s235 = scalar_select %p234, %s16, 1
          %s236 = smul.addr %s235, 2
          %s237 = smul.addr %s236, 4
          %s238 = scalar_lea.vmem %s0, %s237
        $region44: #{fast_att_pool_forward.3} parent=39 // pred_fallthru
          _
      $region40: #{fast_att_pool_forward.3} parent=5 // pred_fallthru
        _
      %p239 = scmp.le.s32.totalorder 1, %s16
      %p240 = scmp.lt.s32.totalorder %s16, 3
      %p241 = pnand %p239, %p240
      %p242 = pneg %p241
      // Predicated region
      $region45: #{fast_att_pool_forward.3} parent=5 // pred_check
        _
      $region46: #{fast_att_pool_forward.3} parent=5 // pred_check_branch
        %244 = sbr.rel (%p241) target = $region48
      $region47: #{fast_att_pool_forward.3} parent=5 // pred_region
        %s245 = ssub.s32 %s16, 1
        %p246 = scmp.lt.s32.totalorder %s21, 1
        %s247 = scalar_select %p246, %s21, 1
        %s248 = smul.addr %s247, 2
        %s249 = smul.addr %s248, 4
        %s250 = scalar_lea.vmem %s0, %s249
        %p251 = pneg %p42
        %p252 = pneg %p39
        %p253 = pneg %p63
        %p254 = pneg %p60
        %p255 = pneg %p84
        %p256 = pneg %p81
        %p257 = pneg %p105
        %p258 = pneg %p102
        %p259 = pneg %p126
        %p260 = pneg %p123
        %p261 = pneg %p147
        %p262 = pneg %p144
        %p263 = pneg %p168
        %p264 = pneg %p165
        %p265 = pneg %p194
        %p266 = pneg %p191
        %s267 = sand.u32 %s181, 1
        %s268 = scalar_lea.sflag [#allocation3], %s267
        %s269 = sand.u32 %s181, 1
        %s270 = scalar_lea.vmem [#allocation2], %s269
        %p271 = scmp.lt.s32.totalorder %s21, 1
        %s272 = scalar_select %p271, %s21, 1
        %s273 = smul.addr %s272, 2
        %s274 = smul.addr %s273, 4
        %s275 = scalar_lea.vmem %s0, %s274
        %v276 = vld [vmem:[%s275] sm:$0xf]
        %v277 = vld [vmem:[%s275 + $0x4] sm:$0xf]
        %v278 = vunpack.c.l.bf16 %v276
        %v279 = vunpack.c.l.bf16 %v277
        %v280 = vld [vmem:[%s1] sm:$0x1]
        %v282 = vlaneseq
        %v283 = vshrl.u32 %v282, 7
        %v284 = vsub.s32 0, %v283
        %v285 = vrot.slane %v280, %v284
        %v287 = vmul.f32 %v278, %v285
        %v288 = vmul.f32 %v279, %v285
        %v289 = vld [vmem:[%s2] sm:$0x1]
        %v291 = vlaneseq
        %v292 = vshrl.u32 %v291, 7
        %v293 = vsub.s32 0, %v292
        %v294 = vrot.slane %v289, %v293
        %v296 = vadd.f32 %v287, %v294
        %v297 = vadd.f32 %v288, %v294
        %v298 = vld [vmem:[%s3] sm:$0xff]
        %v299 = vld [vmem:[%s3 + $0x8] sm:$0xff]
        %v300 = vld [vmem:[%s3 + $0x10] sm:$0xff]
        %v301 = vld [vmem:[%s3 + $0x18] sm:$0xff]
        %v302 = vld [vmem:[%s3 + $0x20] sm:$0xff]
        %v303 = vld [vmem:[%s3 + $0x28] sm:$0xff]
        %v304 = vld [vmem:[%s3 + $0x30] sm:$0xff]
        %v305 = vld [vmem:[%s3 + $0x38] sm:$0xff]
        %v306 = vld [vmem:[%s3 + $0x40] sm:$0xff]
        %v307 = vld [vmem:[%s3 + $0x48] sm:$0xff]
        %v308 = vld [vmem:[%s3 + $0x50] sm:$0xff]
        %v309 = vld [vmem:[%s3 + $0x58] sm:$0xff]
        %v310 = vld [vmem:[%s3 + $0x60] sm:$0xff]
        %v311 = vld [vmem:[%s3 + $0x68] sm:$0xff]
        %v312 = vld [vmem:[%s3 + $0x70] sm:$0xff]
        %v313 = vld [vmem:[%s3 + $0x78] sm:$0xff]
        %v314 = vld [vmem:[%s4] sm:$0x1]
        %v316 = vlaneseq
        %v317 = vshrl.u32 %v316, 7
        %v318 = vsub.s32 0, %v317
        %v319 = vrot.slane %v314, %v318
        %321 = vmatprep.subr.mxu0 0.0
        %322 = vmatpush1.msra.mxu0 %v298
        %323 = vmatprep.subr.mxu0 0.0
        %324 = vmatpush1.msra.mxu0 %v299
        %325 = vmatprep.subr.mxu0 0.0
        %326 = vmatpush1.msra.mxu0 %v300
        %327 = vmatprep.subr.mxu0 0.0
        %328 = vmatpush1.msra.mxu0 %v301
        %329 = vmatprep.subr.mxu0 0.0
        %330 = vmatpush1.msra.mxu0 %v302
        %331 = vmatprep.subr.mxu0 0.0
        %332 = vmatpush1.msra.mxu0 %v303
        %333 = vmatprep.subr.mxu0 0.0
        %334 = vmatpush1.msra.mxu0 %v304
        %335 = vmatprep.subr.mxu0 0.0
        %336 = vmatpush1.msra.mxu0 %v305
        %337 = vmatprep.subr.mxu0 0.0
        %338 = vmatpush1.msra.mxu0 %v306
        %339 = vmatprep.subr.mxu0 0.0
        %340 = vmatpush1.msra.mxu0 %v307
        %341 = vmatprep.subr.mxu0 0.0
        %342 = vmatpush1.msra.mxu0 %v308
        %343 = vmatprep.subr.mxu0 0.0
        %344 = vmatpush1.msra.mxu0 %v309
        %345 = vmatprep.subr.mxu0 0.0
        %346 = vmatpush1.msra.mxu0 %v310
        %347 = vmatprep.subr.mxu0 0.0
        %348 = vmatpush1.msra.mxu0 %v311
        %349 = vmatprep.subr.mxu0 0.0
        %350 = vmatpush1.msra.mxu0 %v312
        %351 = vmatprep.subr.mxu0 0.0
        %352 = vmatpush1.msra.mxu0 %v313
        %353 = vmatprep.subr.mxu0 0.0
        %354 = vmatpush1.msra.mxu0 0.0
        %355 = vmatprep.subr.mxu0 0.0
        %356 = vmatpush1.msra.mxu0 0.0
        %357 = vmatprep.subr.mxu0 0.0
        %358 = vmatpush1.msra.mxu0 0.0
        %359 = vmatprep.subr.mxu0 0.0
        %360 = vmatpush1.msra.mxu0 0.0
        %361 = vmatprep.subr.mxu0 0.0
        %362 = vmatpush1.msra.mxu0 0.0
        %363 = vmatprep.subr.mxu0 0.0
        %364 = vmatpush1.msra.mxu0 0.0
        %365 = vmatprep.subr.mxu0 0.0
        %366 = vmatpush1.msra.mxu0 0.0
        %367 = vmatprep.subr.mxu0 0.0
        %368 = vmatpush1.msra.mxu0 0.0
        %369 = vmatprep.subr.mxu0 0.0
        %370 = vmatpush1.msra.mxu0 0.0
        %371 = vmatprep.subr.mxu0 0.0
        %372 = vmatpush1.msra.mxu0 0.0
        %373 = vmatprep.subr.mxu0 0.0
        %374 = vmatpush1.msra.mxu0 0.0
        %375 = vmatprep.subr.mxu0 0.0
        %376 = vmatpush1.msra.mxu0 0.0
        %377 = vmatprep.subr.mxu0 0.0
        %378 = vmatpush1.msra.mxu0 0.0
        %379 = vmatprep.subr.mxu0 0.0
        %380 = vmatpush1.msra.mxu0 0.0
        %381 = vmatprep.subr.mxu0 0.0
        %382 = vmatpush1.msra.mxu0 0.0
        %383 = vmatprep.subr.mxu0 0.0
        %384 = vmatpush1.msra.mxu0 0.0
        %385 = vmatprep.mubr.f32.mxu0 0.0
        %386 = vmatmul.mubr.f32.gmra.mrb[0].mxu0 %v296
        %v387 = vpop.f32.mrb[0].mxu0
        %v388 = vadd.f32 %v319, %v387
        %v389 = vpop.f32.mrb[0].mxu0
        %390 = vmatprep.mubr.f32.mxu0 0.0
        %391 = vmatmul.mubr.f32.gmra.mrb[0].mxu0 %v297
        %v392 = vpop.f32.mrb[0].mxu0
        %v393 = vadd.f32 %v319, %v392
        %v394 = vpop.f32.mrb[0].mxu0
        %395 = vdwg.mxu0
        %vm396 = vcmask 15360
        %v397 = vsel %vm396, %v388, -inf
        %v398 = vsel %vm396, %v393, -inf
        %v399 = vmax.f32 %v397, %v398
        %v400 = vrot.slane %v399, 4
        %v401 = vmax.f32 %v399, %v400
        %v402 = vrot.slane %v401, 2
        %v403 = vmax.f32 %v401, %v402
        %v404 = vrot.slane %v403, 1
        %v405 = vmax.f32 %v403, %v404
        %v406 = vsub.f32 %v388, %v405
        %v407 = vsub.f32 %v393, %v405
        %v408 = vmul.f32 %v406, 1.442695
        %v409 = vpow.pop %v408
        %v410 = vmul.f32 %v407, 1.442695
        %v411 = vpow.pop %v410
        %v412 = vsel %vm396, %v409, 0.0
        %v413 = vsel %vm396, %v411, 0.0
        %v414 = vadd.f32 %v412, %v413
        %v415 = vrot.slane %v414, 4
        %v416 = vadd.f32 %v414, %v415
        %v417 = vrot.slane %v416, 2
        %v418 = vadd.f32 %v416, %v417
        %v419 = vrot.slane %v418, 1
        %v420 = vadd.f32 %v418, %v419
        %v421 = vrcp.pop %v420
        %v422 = vmul.f32 %v409, %v421
        %v423 = vmul.f32 %v411, %v421
        %424 = vxpose.xlu0.b32.start [1/16] %v422, 128
        %425 = vxpose.xlu0.b32.cont [2/16] %v423, 128
        %426 = vxpose.xlu0.b32.cont [3/16] 0.0, 128
        %427 = vxpose.xlu0.b32.cont [4/16] 0.0, 128
        %428 = vxpose.xlu0.b32.cont [5/16] 0.0, 128
        %429 = vxpose.xlu0.b32.cont [6/16] 0.0, 128
        %430 = vxpose.xlu0.b32.cont [7/16] 0.0, 128
        %431 = vxpose.xlu0.b32.cont [8/16] 0.0, 128
        %432 = vxpose.xlu0.b32.cont [9/16] 0.0, 128
        %433 = vxpose.xlu0.b32.cont [10/16] 0.0, 128
        %434 = vxpose.xlu0.b32.cont [11/16] 0.0, 128
        %435 = vxpose.xlu0.b32.cont [12/16] 0.0, 128
        %436 = vxpose.xlu0.b32.cont [13/16] 0.0, 128
        %437 = vxpose.xlu0.b32.cont [14/16] 0.0, 128
        %438 = vxpose.xlu0.b32.cont [15/16] 0.0, 128
        %439 = vxpose.xlu0.b32.end [16/16] 0.0, 128
        %v440 = vpop.trf.xlu0
        %v441 = vpop.trf.xlu0
        %v442 = vpop.trf.xlu0
        %v443 = vpop.trf.xlu0
        %v444 = vpop.trf.xlu0
        %v445 = vpop.trf.xlu0
        %v446 = vpop.trf.xlu0
        %v447 = vpop.trf.xlu0
        %v448 = vpop.trf.xlu0
        %v449 = vpop.trf.xlu0
        %v450 = vpop.trf.xlu0
        %v451 = vpop.trf.xlu0
        %v452 = vpop.trf.xlu0
        %v453 = vpop.trf.xlu0
        %v454 = vpop.trf.xlu0
        %v455 = vpop.trf.xlu0
        %vm456 = vcmask 130048
        %v458 = vsel %vm456, %v440, 0
        %460 = vmatprep.subr.mxu0 0.0
        %461 = vmatpush1.msra.mxu0 %v388
        %462 = vmatprep.subr.mxu0 0.0
        %463 = vmatpush1.msra.mxu0 %v393
        %464 = vmatprep.subr.mxu0 0.0
        %465 = vmatpush1.msra.mxu0 0.0
        %466 = vmatprep.subr.mxu0 0.0
        %467 = vmatpush1.msra.mxu0 0.0
        %468 = vmatprep.subr.mxu0 0.0
        %469 = vmatpush1.msra.mxu0 0.0
        %470 = vmatprep.subr.mxu0 0.0
        %471 = vmatpush1.msra.mxu0 0.0
        %472 = vmatprep.subr.mxu0 0.0
        %473 = vmatpush1.msra.mxu0 0.0
        %474 = vmatprep.subr.mxu0 0.0
        %475 = vmatpush1.msra.mxu0 0.0
        %476 = vmatprep.subr.mxu0 0.0
        %477 = vmatpush1.msra.mxu0 0.0
        %478 = vmatprep.subr.mxu0 0.0
        %479 = vmatpush1.msra.mxu0 0.0
        %480 = vmatprep.subr.mxu0 0.0
        %481 = vmatpush1.msra.mxu0 0.0
        %482 = vmatprep.subr.mxu0 0.0
        %483 = vmatpush1.msra.mxu0 0.0
        %484 = vmatprep.subr.mxu0 0.0
        %485 = vmatpush1.msra.mxu0 0.0
        %486 = vmatprep.subr.mxu0 0.0
        %487 = vmatpush1.msra.mxu0 0.0
        %488 = vmatprep.subr.mxu0 0.0
        %489 = vmatpush1.msra.mxu0 0.0
        %490 = vmatprep.subr.mxu0 0.0
        %491 = vmatpush1.msra.mxu0 0.0
        %492 = vmatprep.subr.mxu0 0.0
        %493 = vmatpush1.msra.mxu0 0.0
        %494 = vmatprep.subr.mxu0 0.0
        %495 = vmatpush1.msra.mxu0 0.0
        %496 = vmatprep.subr.mxu0 0.0
        %497 = vmatpush1.msra.mxu0 0.0
        %498 = vmatprep.subr.mxu0 0.0
        %499 = vmatpush1.msra.mxu0 0.0
        %500 = vmatprep.subr.mxu0 0.0
        %501 = vmatpush1.msra.mxu0 0.0
        %502 = vmatprep.subr.mxu0 0.0
        %503 = vmatpush1.msra.mxu0 0.0
        %504 = vmatprep.subr.mxu0 0.0
        %505 = vmatpush1.msra.mxu0 0.0
        %506 = vmatprep.subr.mxu0 0.0
        %507 = vmatpush1.msra.mxu0 0.0
        %508 = vmatprep.subr.mxu0 0.0
        %509 = vmatpush1.msra.mxu0 0.0
        %510 = vmatprep.subr.mxu0 0.0
        %511 = vmatpush1.msra.mxu0 0.0
        %512 = vmatprep.subr.mxu0 0.0
        %513 = vmatpush1.msra.mxu0 0.0
        %514 = vmatprep.subr.mxu0 0.0
        %515 = vmatpush1.msra.mxu0 0.0
        %516 = vmatprep.subr.mxu0 0.0
        %517 = vmatpush1.msra.mxu0 0.0
        %518 = vmatprep.subr.mxu0 0.0
        %519 = vmatpush1.msra.mxu0 0.0
        %520 = vmatprep.subr.mxu0 0.0
        %521 = vmatpush1.msra.mxu0 0.0
        %522 = vmatprep.subr.mxu0 0.0
        %523 = vmatpush1.msra.mxu0 0.0
        %524 = vmatprep.mubr.f32.mxu0 0.0
        %525 = vmatmul.mubr.f32.gmra.mrb[0].mxu0 %v458
        %v526 = vpop.f32.mrb[0].mxu0
        %v527 = vadd.f32 0.0, %v526
        %v528 = vpop.f32.mrb[0].mxu0
        %529 = vdwg.mxu0
        %v531 = vunpack.c.l.s4 1934713408
        %v532 = vunpack.c.0.s8 %v531
        %v533 = vlaneseq
        %v534 = vshrl.u32 %v533, 7
        %v535 = vsub.s32 %v532, %v534
        %v536 = vrot.slane %v527, %v535
        %v537 = vcombine.high %v536, 0.0
        %v538 = vld [vmem:[%s5] sm:$0xff]
        %v539 = vld [vmem:[%s5 + $0x8] sm:$0xff]
        %v540 = vld [vmem:[%s5 + $0x10] sm:$0xff]
        %v541 = vld [vmem:[%s5 + $0x18] sm:$0xff]
        %v542 = vld [vmem:[%s5 + $0x20] sm:$0xff]
        %v543 = vld [vmem:[%s5 + $0x28] sm:$0xff]
        %v544 = vld [vmem:[%s5 + $0x30] sm:$0xff]
        %v545 = vld [vmem:[%s5 + $0x38] sm:$0xff]
        %v546 = vld [vmem:[%s5 + $0x40] sm:$0xff]
        %v547 = vld [vmem:[%s5 + $0x48] sm:$0xff]
        %v548 = vld [vmem:[%s5 + $0x50] sm:$0xff]
        %v549 = vld [vmem:[%s5 + $0x58] sm:$0xff]
        %v550 = vld [vmem:[%s5 + $0x60] sm:$0xff]
        %v551 = vld [vmem:[%s5 + $0x68] sm:$0xff]
        %v552 = vld [vmem:[%s5 + $0x70] sm:$0xff]
        %v553 = vld [vmem:[%s5 + $0x78] sm:$0xff]
        %v554 = vld [vmem:[%s5 + $0x80] sm:$0xff]
        %v555 = vld [vmem:[%s5 + $0x88] sm:$0xff]
        %v556 = vld [vmem:[%s5 + $0x90] sm:$0xff]
        %v557 = vld [vmem:[%s5 + $0x98] sm:$0xff]
        %v558 = vld [vmem:[%s5 + $0xa0] sm:$0xff]
        %v559 = vld [vmem:[%s5 + $0xa8] sm:$0xff]
        %v560 = vld [vmem:[%s5 + $0xb0] sm:$0xff]
        %v561 = vld [vmem:[%s5 + $0xb8] sm:$0xff]
        %v562 = vld [vmem:[%s5 + $0xc0] sm:$0xff]
        %v563 = vld [vmem:[%s5 + $0xc8] sm:$0xff]
        %v564 = vld [vmem:[%s5 + $0xd0] sm:$0xff]
        %v565 = vld [vmem:[%s5 + $0xd8] sm:$0xff]
        %v566 = vld [vmem:[%s5 + $0xe0] sm:$0xff]
        %v567 = vld [vmem:[%s5 + $0xe8] sm:$0xff]
        %v568 = vld [vmem:[%s5 + $0xf0] sm:$0xff]
        %v569 = vld [vmem:[%s5 + $0xf8] sm:$0xff]
        %v570 = vld [vmem:[%s6] sm:$0x1]
        %571 = vmatprep.subr.mxu0 0.0
        %572 = vmatpush1.msra.mxu0 %v538
        %573 = vmatprep.subr.mxu0 0.0
        %574 = vmatpush1.msra.mxu0 %v539
        %575 = vmatprep.subr.mxu0 0.0
        %576 = vmatpush1.msra.mxu0 %v540
        %577 = vmatprep.subr.mxu0 0.0
        %578 = vmatpush1.msra.mxu0 %v541
        %579 = vmatprep.subr.mxu0 0.0
        %580 = vmatpush1.msra.mxu0 %v542
        %581 = vmatprep.subr.mxu0 0.0
        %582 = vmatpush1.msra.mxu0 %v543
        %583 = vmatprep.subr.mxu0 0.0
        %584 = vmatpush1.msra.mxu0 %v544
        %585 = vmatprep.subr.mxu0 0.0
        %586 = vmatpush1.msra.mxu0 %v545
        %587 = vmatprep.subr.mxu0 0.0
        %588 = vmatpush1.msra.mxu0 %v546
        %589 = vmatprep.subr.mxu0 0.0
        %590 = vmatpush1.msra.mxu0 %v547
        %591 = vmatprep.subr.mxu0 0.0
        %592 = vmatpush1.msra.mxu0 %v548
        %593 = vmatprep.subr.mxu0 0.0
        %594 = vmatpush1.msra.mxu0 %v549
        %595 = vmatprep.subr.mxu0 0.0
        %596 = vmatpush1.msra.mxu0 %v550
        %597 = vmatprep.subr.mxu0 0.0
        %598 = vmatpush1.msra.mxu0 %v551
        %599 = vmatprep.subr.mxu0 0.0
        %600 = vmatpush1.msra.mxu0 %v552
        %601 = vmatprep.subr.mxu0 0.0
        %602 = vmatpush1.msra.mxu0 %v553
        %603 = vmatprep.subr.mxu0 0.0
        %604 = vmatpush1.msra.mxu0 %v554
        %605 = vmatprep.subr.mxu0 0.0
        %606 = vmatpush1.msra.mxu0 %v555
        %607 = vmatprep.subr.mxu0 0.0
        %608 = vmatpush1.msra.mxu0 %v556
        %609 = vmatprep.subr.mxu0 0.0
        %610 = vmatpush1.msra.mxu0 %v557
        %611 = vmatprep.subr.mxu0 0.0
        %612 = vmatpush1.msra.mxu0 %v558
        %613 = vmatprep.subr.mxu0 0.0
        %614 = vmatpush1.msra.mxu0 %v559
        %615 = vmatprep.subr.mxu0 0.0
        %616 = vmatpush1.msra.mxu0 %v560
        %617 = vmatprep.subr.mxu0 0.0
        %618 = vmatpush1.msra.mxu0 %v561
        %619 = vmatprep.subr.mxu0 0.0
        %620 = vmatpush1.msra.mxu0 %v562
        %621 = vmatprep.subr.mxu0 0.0
        %622 = vmatpush1.msra.mxu0 %v563
        %623 = vmatprep.subr.mxu0 0.0
        %624 = vmatpush1.msra.mxu0 %v564
        %625 = vmatprep.subr.mxu0 0.0
        %626 = vmatpush1.msra.mxu0 %v565
        %627 = vmatprep.subr.mxu0 0.0
        %628 = vmatpush1.msra.mxu0 %v566
        %629 = vmatprep.subr.mxu0 0.0
        %630 = vmatpush1.msra.mxu0 %v567
        %631 = vmatprep.subr.mxu0 0.0
        %632 = vmatpush1.msra.mxu0 %v568
        %633 = vmatprep.subr.mxu0 0.0
        %634 = vmatpush1.msra.mxu0 %v569
        %635 = vmatprep.mubr.f32.mxu0 %v537
        %636 = vmatmul.mubr.f32.gmra.mrb[0].mxu0 %v536
        %v637 = vpop.f32.mrb[0].mxu0
        %v638 = vadd.f32 %v570, %v637
        %v639 = vpop.f32.mrb[0].mxu0
        %640 = vdwg.mxu0
        %v641 = vmax.f32 %v638, 0.0
        %vm642 = vcmask 57344
        %643 = vst.msk [vmem:[%s270] sm:$0x1] %vm642, %v641
        %s644 = sand.u32 %s181, 1
        %s645 = scalar_lea.sflag [#allocation3], %s644
        %s646 = sand.u32 %s181, 1
        %s647 = scalar_lea.vmem [#allocation2], %s646
        // Predicated region
        $region49: #{fast_att_pool_forward.3} parent=47 // pred_check
          %p648 = pneg %p191
        $region50: #{fast_att_pool_forward.3} parent=47 // pred_check_branch
          %650 = sbr.rel (%p648) target = $region52
        $region51: #{fast_att_pool_forward.3} parent=47 // pred_region
          %s652 = ssub.s32 16, 16
          %653 = vsyncadd %s645, %s652
          %s654 = smul.addr %s21, 16
          %s655 = scalar_lea.hbm %s7, %s654
          %s657 = sshll.u32 %s647, 4
          %s658 = int_to_ptr.vmem [resolvable:$true] %s657
          %660 = dma.vmem_to_hbm [thread:$0]  %s658, 16, %s655, %s645
        $region52: #{fast_att_pool_forward.3} parent=47 // pred_fallthru
          _
      $region48: #{fast_att_pool_forward.3} parent=5 // pred_fallthru
        _
      %p661 = scmp.le.s32.totalorder 2, %s16
      // Predicated region
      $region53: #{fast_att_pool_forward.3} parent=5 // pred_check
        %p662 = pneg %p661
      $region54: #{fast_att_pool_forward.3} parent=5 // pred_check_branch
        %664 = sbr.rel (%p662) target = $region56
      $region55: #{fast_att_pool_forward.3} parent=5 // pred_region
        %s665 = ssub.s32 %s16, 2
        // Predicated region
        $region57: #{fast_att_pool_forward.3} parent=55 // pred_check
          %p666 = pneg %p197
        $region58: #{fast_att_pool_forward.3} parent=55 // pred_check_branch
          %668 = sbr.rel (%p666) target = $region60
        $region59: #{fast_att_pool_forward.3} parent=55 // pred_region
          %s669 = sand.u32 %s182, 1
          %s670 = scalar_lea.sflag [#allocation3], %s669
          %s671 = sand.u32 %s182, 1
          %s672 = scalar_lea.vmem [#allocation2], %s671
          %673 = dma.done %s670, 16
        $region60: #{fast_att_pool_forward.3} parent=55 // pred_fallthru
          _
      $region56: #{fast_att_pool_forward.3} parent=5 // pred_fallthru
        _
    $region6: #{fast_att_pool_forward.3} parent=1 // loop_footer
      %s20 = sadd.s32 1, %s16
    $region7: #{fast_att_pool_forward.3} parent=1 // loop_footer_branch
      %15 = sbr.rel target = $region3
    $region8: #{fast_att_pool_forward.3} parent=1 // loop_exit
      _
    %674 = vsyncpa [#allocation3], 1
    %s675 = scalar_lea.sflag [#allocation3], 1
    %676 = vsyncpa %s675, 1

</llo_original>
